<compile_context>
chip_gen: v7x
topology: tpu7x:2x2x1
jax: 0.10.0
libtpu: 0.0.40
codegen_flags: <defaults>
</compile_context>

<pallas_src>
import functools
import math

import numpy as np

import jax
import jax.numpy as jnp
from jax.experimental import pallas as pl
from jax.experimental.pallas import tpu as pltpu

_HALF_PI = float(np.float32(np.pi / 2.0))


def _round_up(n, m):
    return ((n + m - 1) // m) * m


def _cdiv(a, b):
    return -(-a // b)


def _frequency_bands(num_encoding_functions, log_sampling, normalize):
    """Static (numpy) frequency bands matching torch.linspace in float32."""
    F = int(num_encoding_functions)
    if log_sampling:
        f = 2.0 ** np.linspace(0.0, F - 1, F, dtype=np.float32)
    else:
        f = np.linspace(2.0 ** 0.0, 2.0 ** (F - 1), F, dtype=np.float32)
    f = np.asarray(f, np.float32)
    freqs = tuple(float(v) for v in f)
    norms = tuple(1.0 / v for v in freqs) if normalize else None
    pow2 = all(v == float(2.0 ** i) for i, v in enumerate(freqs))
    return freqs, norms, pow2


# ----------------------------------------------------------------------------
# Default path: single kernel writing the interleaved (..., D*(1+2F)) layout.
# ----------------------------------------------------------------------------

def _pe_interleaved_kernel(rep_ref, mix_ref, x_ref, o_ref):
    """One grid step: (tile_m, K) packed input rows -> (tile_m, L) output rows.

    rep_ref : (K, L) 0/1 replication matrix, K = P*D, L = P*out_dim.
    mix_ref : (8, L) per-output-column constants:
              row 0 = frequency, row 1 = phase (0 / pi/2),
              row 2 = trig scale (1 or 1/freq; 0 on identity columns),
              row 3 = copy scale (1 on identity columns; else 0).
    """
    x = x_ref[...].astype(jnp.float32)          # (tile_m, K), lane-dense
    rep = rep_ref[...]                          # (K, L)

    # Replicate every point's D coords across its 1+2F bands using the idle
    # MXU.  bf16x3 operand split => exact even if the matmul truncates f32
    # inputs to bf16 (each split piece is bf16-representable; weights are 0/1).
    h1 = x.astype(jnp.bfloat16).astype(jnp.float32)
    r1 = x - h1
    h2 = r1.astype(jnp.bfloat16).astype(jnp.float32)
    h3 = r1 - h2
    xr = jnp.dot(h3, rep, preferred_element_type=jnp.float32)
    xr = xr + jnp.dot(h2, rep, preferred_element_type=jnp.float32)
    xr = xr + jnp.dot(h1, rep, preferred_element_type=jnp.float32)  # == replicate(x)

    freq = mix_ref[0:1, :]
    phase = mix_ref[1:2, :]
    trig_scale = mix_ref[2:3, :]
    copy_scale = mix_ref[3:4, :]

    # cos(t) = sin(t + pi/2): one transcendental per output lane.
    vals = jnp.sin(xr * freq + phase)
    out = copy_scale * xr + trig_scale * vals
    o_ref[...] = out.astype(o_ref.dtype)


def _choose_group_points(n_points, out_dim):
    """Points packed per kernel row: maximize lane density, keep MXU work small."""
    cands = []
    for p in (64, 48, 32, 24, 16, 12, 8, 6, 4, 3, 2, 1):
        lanes = p * out_dim
        if lanes > 1536 and p != 1:
            continue
        density = lanes / (128.0 * _cdiv(lanes, 128))
        cands.append((p, density))
    if not cands:
        return 1
    top = max(d for _, d in cands)
    good = [p for p, d in cands if d >= top - 0.03]
    dividing = [p for p in good if n_points % p == 0]
    pool = dividing if dividing else good
    return min(pool)


def _interleaved_tables(D, out_dim, P, include_input, freqs, norms):
    """Host-side (numpy) replication matrix and per-column constants."""
    src = np.zeros((out_dim,), np.int64)
    freq_c = np.ones((out_dim,), np.float32)
    phase_c = np.zeros((out_dim,), np.float32)
    trig_c = np.zeros((out_dim,), np.float32)
    copy_c = np.zeros((out_dim,), np.float32)
    c = 0
    if include_input:
        for d in range(D):
            src[c] = d
            copy_c[c] = 1.0
            c += 1
    for k, f in enumerate(freqs):
        n = norms[k] if norms is not None else 1.0
        for d in range(D):                      # sin columns of band k
            src[c] = d
            freq_c[c] = f
            phase_c[c] = 0.0
            trig_c[c] = n
            c += 1
        for d in range(D):                      # cos columns of band k
            src[c] = d
            freq_c[c] = f
            phase_c[c] = _HALF_PI
            trig_c[c] = n
            c += 1
    assert c == out_dim

    K, L = P * D, P * out_dim
    rep = np.zeros((K, L), np.float32)
    mix = np.zeros((8, L), np.float32)
    cols = np.arange(out_dim)
    for p in range(P):
        j0 = p * out_dim
        rep[p * D + src, j0 + cols] = 1.0
        mix[0, j0:j0 + out_dim] = freq_c
        mix[1, j0:j0 + out_dim] = phase_c
        mix[2, j0:j0 + out_dim] = trig_c
        mix[3, j0:j0 + out_dim] = copy_c
    return rep, mix


def positional_encoding(
    x,
    *,
    num_encoding_functions=6,
    include_input=True,
    log_sampling=True,
    normalize=False,
    out_dtype=None,
    group_points=None,
    tile_rows=1024,
):
    """NeRF-style positional encoding; output layout matches the torch module."""
    orig_shape = x.shape
    D = int(orig_shape[-1])
    F = int(num_encoding_functions)
    out_dtype = out_dtype if out_dtype is not None else x.dtype
    lead = orig_shape[:-1]
    num_bands = (1 if include_input else 0) + 2 * F
    out_dim = num_bands * D

    if num_bands == 0:
        return jnp.zeros((*lead, 0), dtype=out_dtype)
    if F == 0:                                   # include_input only -> x itself
        return x.astype(out_dtype)

    freqs, norms, _ = _frequency_bands(F, log_sampling, normalize)
    N = math.prod(lead) if lead else 1
    P = int(group_points) if group_points else _choose_group_points(N, out_dim)
    K, L = P * D, P * out_dim
    rep_np, mix_np = _interleaved_tables(D, out_dim, P, include_input, freqs, norms)

    # Pack P points per row; pad rows only to an 8-row boundary (ragged last
    # grid block handles the tile granularity -- no dead full tiles).
    M = max(8, _round_up(_cdiv(N, P), 8))
    Np = M * P
    xp = x.reshape(N, D)
    if Np != N:
        xp = jnp.pad(xp, ((0, Np - N), (0, 0)))
    x2 = xp.reshape(M, K)

    # >=2 grid steps when possible (megacore); tile stays a few MiB of VMEM.
    tile_m = max(8, min(_round_up(tile_rows, 8), _round_up(_cdiv(M, 2), 8), M))
    grid = _cdiv(M, tile_m)

    out2 = pl.pallas_call(
        _pe_interleaved_kernel,
        out_shape=jax.ShapeDtypeStruct((M, L), out_dtype),
        grid_spec=pltpu.PrefetchScalarGridSpec(
            num_scalar_prefetch=0,
            grid=(grid,),
            in_specs=[
                pl.BlockSpec((K, L), lambda i: (0, 0)),     # replication matrix
                pl.BlockSpec((8, L), lambda i: (0, 0)),     # per-column constants
                pl.BlockSpec((tile_m, K), lambda i: (i, 0)),
            ],
            out_specs=pl.BlockSpec((tile_m, L), lambda i: (i, 0)),
        ),
        compiler_params=pltpu.CompilerParams(
            dimension_semantics=("parallel",),
        ),
    )(jnp.asarray(rep_np), jnp.asarray(mix_np), x2)

    out = out2.reshape(Np, out_dim)
    if Np != N:
        out = out[:N]
    return out.reshape(*lead, out_dim)


# ----------------------------------------------------------------------------
# Optional band-major path (for consumers that can fold the layout into the
# next Linear's weights): returns only the 2F sin/cos bands; band 0 (== x) is
# never re-written (the caller already has x).
# ----------------------------------------------------------------------------

def _trig_bands_kernel(x_ref, o_ref, *, freqs, norms, use_recurrence, refresh_every):
    x = x_ref[...].astype(jnp.float32)           # (tile_r, C) lane-dense slab
    s = c = None
    band = 0
    for k, f in enumerate(freqs):
        if (not use_recurrence) or (k % refresh_every == 0):
            xf = x * jnp.float32(f)
            s = jnp.sin(xf)
            c = jnp.cos(xf)
        else:
            # power-of-two bands: double-angle on the VPU (2 transcendentals
            # per refresh group instead of 2 per band).
            s, c = 2.0 * s * c, 1.0 - 2.0 * (s * s)
        if norms is not None:
            n = jnp.float32(norms[k])
            o_ref[band] = (n * s).astype(o_ref.dtype)
            o_ref[band + 1] = (n * c).astype(o_ref.dtype)
        else:
            o_ref[band] = s.astype(o_ref.dtype)
            o_ref[band + 1] = c.astype(o_ref.dtype)
        band += 2


def positional_encoding_trig_bands(
    x,
    *,
    num_encoding_functions=6,
    log_sampling=True,
    normalize=False,
    refresh_every=4,
    tile_rows=256,
    lane_width=512,
    out_dtype=None,
):
    """Returns shape (2F, *x.shape): [sin f0, cos f0, sin f1, cos f1, ...]."""
    F = int(num_encoding_functions)
    out_dtype = out_dtype if out_dtype is not None else x.dtype
    if F == 0:
        return jnp.zeros((0, *x.shape), dtype=out_dtype)
    assert lane_width % 128 == 0
    freqs, norms, pow2 = _frequency_bands(F, log_sampling, normalize)

    C = lane_width
    total = math.prod(x.shape)
    rows = max(8, _round_up(_cdiv(total, C), 8))
    padded = rows * C
    flat = x.reshape(-1)
    if padded != total:                          # skip the pad copy when aligned
        flat = jnp.pad(flat, (0, padded - total))
    x2 = flat.reshape(rows, C)

    tile_r = max(8, min(_round_up(tile_rows, 8), rows))
    grid = _cdiv(rows, tile_r)
    nb = 2 * F

    kernel = functools.partial(
        _trig_bands_kernel,
        freqs=freqs,
        norms=norms,
        use_recurrence=pow2,
        refresh_every=max(1, int(refresh_every)),
    )
    out = pl.pallas_call(
        kernel,
        out_shape=jax.ShapeDtypeStruct((nb, rows, C), out_dtype),
        grid_spec=pltpu.PrefetchScalarGridSpec(
            num_scalar_prefetch=0,
            grid=(grid,),
            in_specs=[pl.BlockSpec((tile_r, C), lambda i: (i, 0))],
            out_specs=pl.BlockSpec((nb, tile_r, C), lambda i: (0, i, 0)),
        ),
        compiler_params=pltpu.CompilerParams(
            dimension_semantics=("parallel",),
        ),
    )(x2)

    out = out.reshape(nb, padded)
    if padded != total:
        out = out[:, :total]
    return out.reshape((nb, *x.shape))


# ----------------------------------------------------------------------------
# Pure-JAX reference (mirrors the torch module) and self-test.
# ----------------------------------------------------------------------------

def _reference(x, *, num_encoding_functions=6, include_input=True,
               log_sampling=True, normalize=False):
    freqs, norms, _ = _frequency_bands(num_encoding_functions, log_sampling, normalize)
    enc = [x] if include_input else []
    for k, f in enumerate(freqs):
        for fn in (jnp.sin, jnp.cos):
            v = fn(x * jnp.float32(f))
            if normalize:
                v = jnp.float32(norms[k]) * v
            enc.append(v)
    return enc[0] if len(enc) == 1 else jnp.concatenate(enc, axis=-1)


if __name__ == "__main__":
    key = jax.random.PRNGKey(0)
    k0, k1 = jax.random.split(key)

    # Small shape consistent with the module: batch=2, seq=8, input_dim=3.
    x = jax.random.uniform(k0, (2, 8, 3), dtype=jnp.float32, minval=-1.0, maxval=1.0)

    out = jax.block_until_ready(positional_encoding(x))
    ref = _reference(x)
    assert out.shape == (2, 8, 3 * (1 + 2 * 6)), out.shape
    # cos is computed as sin(t + pi/2): deviation <= ~2e-6 at the highest band.
    assert jnp.allclose(out, ref, atol=2e-5, rtol=1e-5), float(jnp.max(jnp.abs(out - ref)))

    # normalize=True and linear (non power-of-two) sampling paths.
    out_n = jax.block_until_ready(positional_encoding(x, normalize=True))
    assert jnp.allclose(out_n, _reference(x, normalize=True), atol=2e-5, rtol=1e-5)

    out_l = jax.block_until_ready(positional_encoding(x, log_sampling=False))
    assert jnp.allclose(out_l, _reference(x, log_sampling=False), atol=2e-5, rtol=1e-5)

    out_ni = jax.block_until_ready(positional_encoding(x, include_input=False))
    assert jnp.allclose(out_ni, _reference(x, include_input=False), atol=2e-5, rtol=1e-5)

    # Ragged / padded case (N not a multiple of the packing factor or 8 rows).
    xr = jax.random.uniform(k1, (257, 3), dtype=jnp.float32, minval=-1.0, maxval=1.0)
    out_r = jax.block_until_ready(positional_encoding(xr))
    assert out_r.shape == (257, 39), out_r.shape
    assert jnp.allclose(out_r, _reference(xr), atol=2e-5, rtol=1e-5)

    # Band-major variant (sin/cos bands only; band 0 == x stays with the caller).
    bands = jax.block_until_ready(positional_encoding_trig_bands(x))
    freqs, _, _ = _frequency_bands(6, True, False)
    ref_bands = jnp.stack([fn(x * jnp.float32(f)) for f in freqs for fn in (jnp.sin, jnp.cos)])
    assert bands.shape == (12, 2, 8, 3), bands.shape
    assert jnp.allclose(bands, ref_bands, atol=2e-5, rtol=1e-5)

    print("KERNEL_OK")
</pallas_src>

<mosaic_0001>
module attributes {stable_mosaic.version = 11 : i64} {
  func.func @_pe_interleaved_kernel(%arg0: i32, %arg1: memref<48x624xf32, #tpu.memory_space<vmem>>, %arg2: memref<8x624xf32, #tpu.memory_space<vmem>>, %arg3: memref<8x48xf32, #tpu.memory_space<vmem>>, %arg4: memref<8x624xf32, #tpu.memory_space<vmem>>) attributes {dimension_semantics = [#tpu.dimension_semantics<parallel>], iteration_bounds = array<i64: 1>, scalar_prefetch = 0 : i64, scratch_operands = 0 : i64, tpu.core_type = #tpu.core_type<tc>, window_params = [{pipeline_mode = #tpu.pipeline_mode<synchronous>, transform_indices = @transform_0, window_bounds = array<i64: 48, 624>}, {pipeline_mode = #tpu.pipeline_mode<synchronous>, transform_indices = @transform_1, window_bounds = array<i64: 8, 624>}, {transform_indices = @transform_2, window_bounds = array<i64: 8, 48>}, {transform_indices = @transform_3, window_bounds = array<i64: 8, 624>}]} {
    %c0 = arith.constant 0 : index
    %c0_0 = arith.constant 0 : index
    %0 = vector.load %arg3[%c0, %c0_0] : memref<8x48xf32, #tpu.memory_space<vmem>>, vector<8x48xf32>
    %c0_1 = arith.constant 0 : index
    %c0_2 = arith.constant 0 : index
    %1 = vector.load %arg1[%c0_1, %c0_2] : memref<48x624xf32, #tpu.memory_space<vmem>>, vector<48x624xf32>
    %2 = arith.truncf %0 : vector<8x48xf32> to vector<8x48xbf16>
    %3 = arith.extf %2 : vector<8x48xbf16> to vector<8x48xf32>
    %4 = arith.subf %0, %3 : vector<8x48xf32>
    %5 = arith.truncf %4 : vector<8x48xf32> to vector<8x48xbf16>
    %6 = arith.extf %5 : vector<8x48xbf16> to vector<8x48xf32>
    %7 = arith.subf %4, %6 : vector<8x48xf32>
    %cst = arith.constant dense<0.000000e+00> : vector<8x624xf32>
    %8 = tpu.matmul %7, %1, %cst {dimension_numbers = #tpu.dot_dimension_numbers<[1], [0], [0], [1], [0, 0, 1, 1], [], []>} : vector<8x48xf32>, vector<48x624xf32>, vector<8x624xf32> -> vector<8x624xf32>
    %cst_3 = arith.constant dense<0.000000e+00> : vector<8x624xf32>
    %9 = tpu.matmul %6, %1, %cst_3 {dimension_numbers = #tpu.dot_dimension_numbers<[1], [0], [0], [1], [0, 0, 1, 1], [], []>} : vector<8x48xf32>, vector<48x624xf32>, vector<8x624xf32> -> vector<8x624xf32>
    %10 = arith.addf %8, %9 : vector<8x624xf32>
    %cst_4 = arith.constant dense<0.000000e+00> : vector<8x624xf32>
    %11 = tpu.matmul %3, %1, %cst_4 {dimension_numbers = #tpu.dot_dimension_numbers<[1], [0], [0], [1], [0, 0, 1, 1], [], []>} : vector<8x48xf32>, vector<48x624xf32>, vector<8x624xf32> -> vector<8x624xf32>
    %12 = arith.addf %10, %11 : vector<8x624xf32>
    %c0_5 = arith.constant 0 : index
    %c0_6 = arith.constant 0 : index
    %13 = vector.load %arg2[%c0_5, %c0_6] : memref<8x624xf32, #tpu.memory_space<vmem>>, vector<1x624xf32>
    %c1 = arith.constant 1 : index
    %c0_7 = arith.constant 0 : index
    %14 = vector.load %arg2[%c1, %c0_7] : memref<8x624xf32, #tpu.memory_space<vmem>>, vector<1x624xf32>
    %c2 = arith.constant 2 : index
    %c0_8 = arith.constant 0 : index
    %15 = vector.load %arg2[%c2, %c0_8] : memref<8x624xf32, #tpu.memory_space<vmem>>, vector<1x624xf32>
    %c3 = arith.constant 3 : index
    %c0_9 = arith.constant 0 : index
    %16 = vector.load %arg2[%c3, %c0_9] : memref<8x624xf32, #tpu.memory_space<vmem>>, vector<1x624xf32>
    %17 = vector.broadcast %13 : vector<1x624xf32> to vector<8x624xf32>
    %18 = arith.mulf %12, %17 : vector<8x624xf32>
    %19 = vector.broadcast %14 : vector<1x624xf32> to vector<8x624xf32>
    %20 = arith.addf %18, %19 : vector<8x624xf32>
    %21 = math.sin %20 : vector<8x624xf32>
    %22 = vector.broadcast %16 : vector<1x624xf32> to vector<8x624xf32>
    %23 = arith.mulf %22, %12 : vector<8x624xf32>
    %24 = vector.broadcast %15 : vector<1x624xf32> to vector<8x624xf32>
    %25 = arith.mulf %24, %21 : vector<8x624xf32>
    %26 = arith.addf %23, %25 : vector<8x624xf32>
    %c0_10 = arith.constant 0 : index
    %c0_11 = arith.constant 0 : index
    %27 = vector.load %arg4[%c0_10, %c0_11] : memref<8x624xf32, #tpu.memory_space<vmem>>, vector<8x624xf32>
    tpu.vector_store %arg4[%c0_10, %c0_11], %26 {strides = array<i32>} : memref<8x624xf32, #tpu.memory_space<vmem>>, vector<8x624xf32>,
    return
  }
  func.func @transform_0(%arg0: i32) -> (i32, i32) {
    %c0_i32 = arith.constant 0 : i32
    %c0_i32_0 = arith.constant 0 : i32
    %c0_i32_1 = arith.constant 0 : i32
    return %c0_i32, %c0_i32_0 : i32, i32
  }
  func.func @transform_1(%arg0: i32) -> (i32, i32) {
    %c0_i32 = arith.constant 0 : i32
    %c0_i32_0 = arith.constant 0 : i32
    %c0_i32_1 = arith.constant 0 : i32
    return %c0_i32, %c0_i32_0 : i32, i32
  }
  func.func @transform_2(%arg0: i32) -> (i32, i32) {
    %c0_i32 = arith.constant 0 : i32
    %c0_i32_0 = arith.constant 0 : i32
    return %arg0, %c0_i32 : i32, i32
  }
  func.func @transform_3(%arg0: i32) -> (i32, i32) {
    %c0_i32 = arith.constant 0 : i32
    %c0_i32_0 = arith.constant 0 : i32
    return %arg0, %c0_i32 : i32, i32
  }
}

</mosaic_0001>

<llo_original>
// kernel: tpu_custom_call.1
$region0: #{tpu_custom_call.1}
  #allocation0 [shape = 'u32[]', space=smem, size = 0x4, offset = 0x4, fixed_abs, tag = 'smem constant byte address 0x4 - core index']
  #allocation1 [shape = 'u32[144,128]{1,0:T(1,128)}', space=vmem, size = 0x12000, scoped, tag = 'internal scratch']
  %s0 = inlined_call_operand.hbm [shape: f32[48,624], index: 0, kind: input, shape index: {}]
  %s1 = inlined_call_operand.hbm [shape: f32[8,624], index: 1, kind: input, shape index: {}]
  %s2 = inlined_call_operand.hbm [shape: f32[8,48], index: 2, kind: input, shape index: {}]
  %s3 = inlined_call_operand.hbm [shape: f32[8,624], index: 3, kind: output, shape index: {}]
  %s4 = sld [smem:[#allocation0]]
  $region34: #{tpu_custom_call.1} parent=0
    _
  %s6 = ssub.s32 1, %s4
  %s7 = scalar_select 0, %s6, %s4
  $region1: #{tpu_custom_call.1} parent=0
    #allocation2 [shape = 'u8[122880]{0}', space=vmem, size = 0x1e000, scoped, tag = 'input window, operand 0, single buffered']
    #allocation3 [shape = 's32[1]{0}', space=sflag, size = 0x4, scoped, tag = 'scoped memory for tpu_custom_call.1']
    #allocation4 [shape = 's32[1]{0}', space=sflag, size = 0x4, scoped, tag = 'scoped memory for tpu_custom_call.1']
    #allocation5 [shape = 'u8[20480]{0}', space=vmem, size = 0x5000, scoped, tag = 'input window, operand 1, single buffered']
    #allocation6 [shape = 's32[1]{0}', space=sflag, size = 0x4, scoped, tag = 'scoped memory for tpu_custom_call.1']
    #allocation7 [shape = 'u8[4096]{0}', space=vmem, size = 0x1000, scoped, tag = 'input window, operand 2, single buffered']
    #allocation8 [shape = 'u8[20480]{0}', space=vmem, size = 0x5000, scoped, tag = 'output window, operand 0, single buffered']
    %8 = vsyncpa [#allocation3], 0
    %9 = vsyncpa [#allocation6], 0
    %10 = vsyncpa [#allocation4], 0
    // Predicated region
    $region2: #{tpu_custom_call.1} parent=1 // pred_check
      _
    $region3: #{tpu_custom_call.1} parent=1 // pred_check_branch
      %12 = sbr.rel (0) target = $region5
    $region4: #{tpu_custom_call.1} parent=1 // pred_region
      %s14 = ssub.s32 3840, 3840
      %15 = vsyncadd [#allocation3], %s14
      %s16 = sshll.u32 [#allocation2], 4
      %s17 = int_to_ptr.vmem [resolvable:$true] %s16
      %22 = dma.hbm_to_vmem [thread:$0]  %s0, 3840, %s17, [#allocation3], 640, 640, 40
    $region5: #{tpu_custom_call.1} parent=1 // pred_fallthru
      _
    // Predicated region
    $region6: #{tpu_custom_call.1} parent=1 // pred_check
      _
    $region7: #{tpu_custom_call.1} parent=1 // pred_check_branch
      %24 = sbr.rel (0) target = $region9
    $region8: #{tpu_custom_call.1} parent=1 // pred_region
      %s26 = ssub.s32 640, 640
      %27 = vsyncadd [#allocation6], %s26
      %s29 = sshll.u32 [#allocation5], 4
      %s30 = int_to_ptr.vmem [resolvable:$true] %s29
      %32 = dma.hbm_to_vmem [thread:$0]  %s1, 640, %s30, [#allocation6]
    $region9: #{tpu_custom_call.1} parent=1 // pred_fallthru
      _
    // Predicated region
    $region10: #{tpu_custom_call.1} parent=1 // pred_check
      _
    $region11: #{tpu_custom_call.1} parent=1 // pred_check_branch
      %34 = sbr.rel (0) target = $region13
    $region12: #{tpu_custom_call.1} parent=1 // pred_region
      %s36 = ssub.s32 128, 128
      %37 = vsyncadd [#allocation6], %s36
      %s39 = sshll.u32 [#allocation7], 4
      %s40 = int_to_ptr.vmem [resolvable:$true] %s39
      %42 = dma.hbm_to_vmem [thread:$0]  %s2, 128, %s40, [#allocation6]
    $region13: #{tpu_custom_call.1} parent=1 // pred_fallthru
      _
    // Predicated region
    $region14: #{tpu_custom_call.1} parent=1 // pred_check
      _
    $region15: #{tpu_custom_call.1} parent=1 // pred_check_branch
      %44 = sbr.rel (0) target = $region17
    $region16: #{tpu_custom_call.1} parent=1 // pred_region
      %45 = dma.done [#allocation3], 3840
    $region17: #{tpu_custom_call.1} parent=1 // pred_fallthru
      _
    // Predicated region
    $region18: #{tpu_custom_call.1} parent=1 // pred_check
      _
    $region19: #{tpu_custom_call.1} parent=1 // pred_check_branch
      %47 = sbr.rel (0) target = $region21
    $region20: #{tpu_custom_call.1} parent=1 // pred_region
      %48 = dma.done [#allocation6], 640
    $region21: #{tpu_custom_call.1} parent=1 // pred_fallthru
      _
    // Predicated region
    $region22: #{tpu_custom_call.1} parent=1 // pred_check
      _
    $region23: #{tpu_custom_call.1} parent=1 // pred_check_branch
      %50 = sbr.rel (0) target = $region25
    $region24: #{tpu_custom_call.1} parent=1 // pred_region
      %51 = dma.done [#allocation6], 128
    $region25: #{tpu_custom_call.1} parent=1 // pred_fallthru
      _
    %v52 = vld [vmem:[#allocation7] sm:$0xff]
    %v53 = vld [vmem:[#allocation2] sm:$0xff]
    %v54 = vld [vmem:[#allocation2 + $0x8] sm:$0xff]
    %v55 = vld [vmem:[#allocation2 + $0x10] sm:$0xff]
    %v56 = vld [vmem:[#allocation2 + $0x18] sm:$0xff]
    %v57 = vld [vmem:[#allocation2 + $0x20] sm:$0xff]
    %v58 = vld [vmem:[#allocation2 + $0x28] sm:$0xff]
    %v59 = vld [vmem:[#allocation2 + $0x30] sm:$0xff]
    %v60 = vld [vmem:[#allocation2 + $0x38] sm:$0xff]
    %v61 = vld [vmem:[#allocation2 + $0x40] sm:$0xff]
    %v62 = vld [vmem:[#allocation2 + $0x48] sm:$0xff]
    %v63 = vld [vmem:[#allocation2 + $0x50] sm:$0xff]
    %v64 = vld [vmem:[#allocation2 + $0x58] sm:$0xff]
    %v65 = vld [vmem:[#allocation2 + $0x60] sm:$0xff]
    %v66 = vld [vmem:[#allocation2 + $0x68] sm:$0xff]
    %v67 = vld [vmem:[#allocation2 + $0x70] sm:$0xff]
    %v68 = vld [vmem:[#allocation2 + $0x78] sm:$0xff]
    %v69 = vld [vmem:[#allocation2 + $0x80] sm:$0xff]
    %v70 = vld [vmem:[#allocation2 + $0x88] sm:$0xff]
    %v71 = vld [vmem:[#allocation2 + $0x90] sm:$0xff]
    %v72 = vld [vmem:[#allocation2 + $0x98] sm:$0xff]
    %v73 = vld [vmem:[#allocation2 + $0xa0] sm:$0xff]
    %v74 = vld [vmem:[#allocation2 + $0xa8] sm:$0xff]
    %v75 = vld [vmem:[#allocation2 + $0xb0] sm:$0xff]
    %v76 = vld [vmem:[#allocation2 + $0xb8] sm:$0xff]
    %v77 = vld [vmem:[#allocation2 + $0xc0] sm:$0xff]
    %v78 = vld [vmem:[#allocation2 + $0xc8] sm:$0xff]
    %v79 = vld [vmem:[#allocation2 + $0xd0] sm:$0xff]
    %v80 = vld [vmem:[#allocation2 + $0xd8] sm:$0xff]
    %v81 = vld [vmem:[#allocation2 + $0xe0] sm:$0xff]
    %v82 = vld [vmem:[#allocation2 + $0xe8] sm:$0xff]
    %v83 = vpack.c.bf16 %v52, %v52
    %v84 = vunpack.c.l.bf16 %v83
    %v85 = vsub.f32 %v52, %v84
    %v86 = vpack.c.bf16 %v85, %v85
    %v87 = vunpack.c.l.bf16 %v86
    %v88 = vsub.f32 %v85, %v87
    %vm89 = vcmask 392192
    %v91 = vsel %vm89, %v87, 0
    %93 = vmatprep.subr.mxu0 %v54
    %94 = vmatpush1.msra.mxu0 %v53
    %95 = vmatprep.subr.mxu0 %v59
    %96 = vmatpush1.msra.mxu0 %v58
    %97 = vmatprep.subr.mxu0 %v64
    %98 = vmatpush1.msra.mxu0 %v63
    %99 = vmatprep.subr.mxu0 %v69
    %100 = vmatpush1.msra.mxu0 %v68
    %101 = vmatprep.subr.mxu0 %v74
    %102 = vmatpush1.msra.mxu0 %v73
    %103 = vmatprep.subr.mxu0 %v79
    %104 = vmatpush1.msra.mxu0 %v78
    %105 = vmatprep.subr.mxu0 0.0
    %106 = vmatpush1.msra.mxu0 0.0
    %107 = vmatprep.subr.mxu0 0.0
    %108 = vmatpush1.msra.mxu0 0.0
    %109 = vmatprep.subr.mxu0 0.0
    %110 = vmatpush1.msra.mxu0 0.0
    %111 = vmatprep.subr.mxu0 0.0
    %112 = vmatpush1.msra.mxu0 0.0
    %113 = vmatprep.subr.mxu0 0.0
    %114 = vmatpush1.msra.mxu0 0.0
    %115 = vmatprep.subr.mxu0 0.0
    %116 = vmatpush1.msra.mxu0 0.0
    %117 = vmatprep.subr.mxu0 0.0
    %118 = vmatpush1.msra.mxu0 0.0
    %119 = vmatprep.subr.mxu0 0.0
    %120 = vmatpush1.msra.mxu0 0.0
    %121 = vmatprep.subr.mxu0 0.0
    %122 = vmatpush1.msra.mxu0 0.0
    %123 = vmatprep.subr.mxu0 0.0
    %124 = vmatpush1.msra.mxu0 0.0
    %125 = vmatprep.subr.mxu0 0.0
    %126 = vmatpush1.msra.mxu0 0.0
    %127 = vmatprep.subr.mxu0 0.0
    %128 = vmatpush1.msra.mxu0 0.0
    %129 = vmatprep.subr.mxu0 0.0
    %130 = vmatpush1.msra.mxu0 0.0
    %131 = vmatprep.subr.mxu0 0.0
    %132 = vmatpush1.msra.mxu0 0.0
    %133 = vmatprep.subr.mxu0 0.0
    %134 = vmatpush1.msra.mxu0 0.0
    %135 = vmatprep.subr.mxu0 0.0
    %136 = vmatpush1.msra.mxu0 0.0
    %137 = vmatprep.subr.mxu0 0.0
    %138 = vmatpush1.msra.mxu0 0.0
    %139 = vmatprep.subr.mxu0 0.0
    %140 = vmatpush1.msra.mxu0 0.0
    %141 = vmatprep.subr.mxu0 0.0
    %142 = vmatpush1.msra.mxu0 0.0
    %143 = vmatprep.subr.mxu0 0.0
    %144 = vmatpush1.msra.mxu0 0.0
    %145 = vmatprep.subr.mxu0 0.0
    %146 = vmatpush1.msra.mxu0 0.0
    %147 = vmatprep.subr.mxu0 0.0
    %148 = vmatpush1.msra.mxu0 0.0
    %149 = vmatprep.subr.mxu0 0.0
    %150 = vmatpush1.msra.mxu0 0.0
    %151 = vmatprep.subr.mxu0 0.0
    %152 = vmatpush1.msra.mxu0 0.0
    %153 = vmatprep.subr.mxu0 0.0
    %154 = vmatpush1.msra.mxu0 0.0
    %155 = vmatprep.subr.mxu0 0.0
    %156 = vmatpush1.msra.mxu0 0.0
    %157 = vmatprep.mubr.f32.mxu0 0.0
    %158 = vmatmul.mubr.f32.gmra.mrb[0].mxu0 %v91
    %v159 = vpop.f32.mrb[0].mxu0
    %v160 = vadd.f32 0.0, %v159
    %v161 = vpop.f32.mrb[0].mxu0
    %v162 = vadd.f32 0.0, %v161
    %163 = vdwg.mxu0
    %164 = vmatprep.subr.mxu0 %v56
    %165 = vmatpush1.msra.mxu0 %v55
    %166 = vmatprep.subr.mxu0 %v61
    %167 = vmatpush1.msra.mxu0 %v60
    %168 = vmatprep.subr.mxu0 %v66
    %169 = vmatpush1.msra.mxu0 %v65
    %170 = vmatprep.subr.mxu0 %v71
    %171 = vmatpush1.msra.mxu0 %v70
    %172 = vmatprep.subr.mxu0 %v76
    %173 = vmatpush1.msra.mxu0 %v75
    %174 = vmatprep.subr.mxu0 %v81
    %175 = vmatpush1.msra.mxu0 %v80
    %176 = vmatprep.subr.mxu0 0.0
    %177 = vmatpush1.msra.mxu0 0.0
    %178 = vmatprep.subr.mxu0 0.0
    %179 = vmatpush1.msra.mxu0 0.0
    %180 = vmatprep.subr.mxu0 0.0
    %181 = vmatpush1.msra.mxu0 0.0
    %182 = vmatprep.subr.mxu0 0.0
    %183 = vmatpush1.msra.mxu0 0.0
    %184 = vmatprep.subr.mxu0 0.0
    %185 = vmatpush1.msra.mxu0 0.0
    %186 = vmatprep.subr.mxu0 0.0
    %187 = vmatpush1.msra.mxu0 0.0
    %188 = vmatprep.subr.mxu0 0.0
    %189 = vmatpush1.msra.mxu0 0.0
    %190 = vmatprep.subr.mxu0 0.0
    %191 = vmatpush1.msra.mxu0 0.0
    %192 = vmatprep.subr.mxu0 0.0
    %193 = vmatpush1.msra.mxu0 0.0
    %194 = vmatprep.subr.mxu0 0.0
    %195 = vmatpush1.msra.mxu0 0.0
    %196 = vmatprep.subr.mxu0 0.0
    %197 = vmatpush1.msra.mxu0 0.0
    %198 = vmatprep.subr.mxu0 0.0
    %199 = vmatpush1.msra.mxu0 0.0
    %200 = vmatprep.subr.mxu0 0.0
    %201 = vmatpush1.msra.mxu0 0.0
    %202 = vmatprep.subr.mxu0 0.0
    %203 = vmatpush1.msra.mxu0 0.0
    %204 = vmatprep.subr.mxu0 0.0
    %205 = vmatpush1.msra.mxu0 0.0
    %206 = vmatprep.subr.mxu0 0.0
    %207 = vmatpush1.msra.mxu0 0.0
    %208 = vmatprep.subr.mxu0 0.0
    %209 = vmatpush1.msra.mxu0 0.0
    %210 = vmatprep.subr.mxu0 0.0
    %211 = vmatpush1.msra.mxu0 0.0
    %212 = vmatprep.subr.mxu0 0.0
    %213 = vmatpush1.msra.mxu0 0.0
    %214 = vmatprep.subr.mxu0 0.0
    %215 = vmatpush1.msra.mxu0 0.0
    %216 = vmatprep.subr.mxu0 0.0
    %217 = vmatpush1.msra.mxu0 0.0
    %218 = vmatprep.subr.mxu0 0.0
    %219 = vmatpush1.msra.mxu0 0.0
    %220 = vmatprep.subr.mxu0 0.0
    %221 = vmatpush1.msra.mxu0 0.0
    %222 = vmatprep.subr.mxu0 0.0
    %223 = vmatpush1.msra.mxu0 0.0
    %224 = vmatprep.subr.mxu0 0.0
    %225 = vmatpush1.msra.mxu0 0.0
    %226 = vmatprep.subr.mxu0 0.0
    %227 = vmatpush1.msra.mxu0 0.0
    %228 = vmatprep.mubr.f32.mxu0 0.0
    %229 = vmatmul.mubr.f32.gmra.mrb[0].mxu0 %v91
    %v230 = vpop.f32.mrb[0].mxu0
    %v231 = vadd.f32 0.0, %v230
    %v232 = vpop.f32.mrb[0].mxu0
    %v233 = vadd.f32 0.0, %v232
    %234 = vdwg.mxu0
    %235 = vmatprep.subr.mxu0 0.0
    %236 = vmatpush1.msra.mxu0 %v57
    %237 = vmatprep.subr.mxu0 0.0
    %238 = vmatpush1.msra.mxu0 %v62
    %239 = vmatprep.subr.mxu0 0.0
    %240 = vmatpush1.msra.mxu0 %v67
    %241 = vmatprep.subr.mxu0 0.0
    %242 = vmatpush1.msra.mxu0 %v72
    %243 = vmatprep.subr.mxu0 0.0
    %244 = vmatpush1.msra.mxu0 %v77
    %245 = vmatprep.subr.mxu0 0.0
    %246 = vmatpush1.msra.mxu0 %v82
    %247 = vmatprep.subr.mxu0 0.0
    %248 = vmatpush1.msra.mxu0 0.0
    %249 = vmatprep.subr.mxu0 0.0
    %250 = vmatpush1.msra.mxu0 0.0
    %251 = vmatprep.subr.mxu0 0.0
    %252 = vmatpush1.msra.mxu0 0.0
    %253 = vmatprep.subr.mxu0 0.0
    %254 = vmatpush1.msra.mxu0 0.0
    %255 = vmatprep.subr.mxu0 0.0
    %256 = vmatpush1.msra.mxu0 0.0
    %257 = vmatprep.subr.mxu0 0.0
    %258 = vmatpush1.msra.mxu0 0.0
    %259 = vmatprep.subr.mxu0 0.0
    %260 = vmatpush1.msra.mxu0 0.0
    %261 = vmatprep.subr.mxu0 0.0
    %262 = vmatpush1.msra.mxu0 0.0
    %263 = vmatprep.subr.mxu0 0.0
    %264 = vmatpush1.msra.mxu0 0.0
    %265 = vmatprep.subr.mxu0 0.0
    %266 = vmatpush1.msra.mxu0 0.0
    %267 = vmatprep.subr.mxu0 0.0
    %268 = vmatpush1.msra.mxu0 0.0
    %269 = vmatprep.subr.mxu0 0.0
    %270 = vmatpush1.msra.mxu0 0.0
    %271 = vmatprep.subr.mxu0 0.0
    %272 = vmatpush1.msra.mxu0 0.0
    %273 = vmatprep.subr.mxu0 0.0
    %274 = vmatpush1.msra.mxu0 0.0
    %275 = vmatprep.subr.mxu0 0.0
    %276 = vmatpush1.msra.mxu0 0.0
    %277 = vmatprep.subr.mxu0 0.0
    %278 = vmatpush1.msra.mxu0 0.0
    %279 = vmatprep.subr.mxu0 0.0
    %280 = vmatpush1.msra.mxu0 0.0
    %281 = vmatprep.subr.mxu0 0.0
    %282 = vmatpush1.msra.mxu0 0.0
    %283 = vmatprep.subr.mxu0 0.0
    %284 = vmatpush1.msra.mxu0 0.0
    %285 = vmatprep.subr.mxu0 0.0
    %286 = vmatpush1.msra.mxu0 0.0
    %287 = vmatprep.subr.mxu0 0.0
    %288 = vmatpush1.msra.mxu0 0.0
    %289 = vmatprep.subr.mxu0 0.0
    %290 = vmatpush1.msra.mxu0 0.0
    %291 = vmatprep.subr.mxu0 0.0
    %292 = vmatpush1.msra.mxu0 0.0
    %293 = vmatprep.subr.mxu0 0.0
    %294 = vmatpush1.msra.mxu0 0.0
    %295 = vmatprep.subr.mxu0 0.0
    %296 = vmatpush1.msra.mxu0 0.0
    %297 = vmatprep.subr.mxu0 0.0
    %298 = vmatpush1.msra.mxu0 0.0
    %299 = vmatprep.mubr.f32.mxu0 0.0
    %300 = vmatmul.mubr.f32.gmra.mrb[0].mxu0 %v91
    %v301 = vpop.f32.mrb[0].mxu0
    %v302 = vadd.f32 0.0, %v301
    %v303 = vpop.f32.mrb[0].mxu0
    %304 = vdwg.mxu0
    %v306 = vsel %vm89, %v88, 0
    %308 = vmatprep.subr.mxu0 %v54
    %309 = vmatpush1.msra.mxu0 %v53
    %310 = vmatprep.subr.mxu0 %v59
    %311 = vmatpush1.msra.mxu0 %v58
    %312 = vmatprep.subr.mxu0 %v64
    %313 = vmatpush1.msra.mxu0 %v63
    %314 = vmatprep.subr.mxu0 %v69
    %315 = vmatpush1.msra.mxu0 %v68
    %316 = vmatprep.subr.mxu0 %v74
    %317 = vmatpush1.msra.mxu0 %v73
    %318 = vmatprep.subr.mxu0 %v79
    %319 = vmatpush1.msra.mxu0 %v78
    %320 = vmatprep.subr.mxu0 0.0
    %321 = vmatpush1.msra.mxu0 0.0
    %322 = vmatprep.subr.mxu0 0.0
    %323 = vmatpush1.msra.mxu0 0.0
    %324 = vmatprep.subr.mxu0 0.0
    %325 = vmatpush1.msra.mxu0 0.0
    %326 = vmatprep.subr.mxu0 0.0
    %327 = vmatpush1.msra.mxu0 0.0
    %328 = vmatprep.subr.mxu0 0.0
    %329 = vmatpush1.msra.mxu0 0.0
    %330 = vmatprep.subr.mxu0 0.0
    %331 = vmatpush1.msra.mxu0 0.0
    %332 = vmatprep.subr.mxu0 0.0
    %333 = vmatpush1.msra.mxu0 0.0
    %334 = vmatprep.subr.mxu0 0.0
    %335 = vmatpush1.msra.mxu0 0.0
    %336 = vmatprep.subr.mxu0 0.0
    %337 = vmatpush1.msra.mxu0 0.0
    %338 = vmatprep.subr.mxu0 0.0
    %339 = vmatpush1.msra.mxu0 0.0
    %340 = vmatprep.subr.mxu0 0.0
    %341 = vmatpush1.msra.mxu0 0.0
    %342 = vmatprep.subr.mxu0 0.0
    %343 = vmatpush1.msra.mxu0 0.0
    %344 = vmatprep.subr.mxu0 0.0
    %345 = vmatpush1.msra.mxu0 0.0
    %346 = vmatprep.subr.mxu0 0.0
    %347 = vmatpush1.msra.mxu0 0.0
    %348 = vmatprep.subr.mxu0 0.0
    %349 = vmatpush1.msra.mxu0 0.0
    %350 = vmatprep.subr.mxu0 0.0
    %351 = vmatpush1.msra.mxu0 0.0
    %352 = vmatprep.subr.mxu0 0.0
    %353 = vmatpush1.msra.mxu0 0.0
    %354 = vmatprep.subr.mxu0 0.0
    %355 = vmatpush1.msra.mxu0 0.0
    %356 = vmatprep.subr.mxu0 0.0
    %357 = vmatpush1.msra.mxu0 0.0
    %358 = vmatprep.subr.mxu0 0.0
    %359 = vmatpush1.msra.mxu0 0.0
    %360 = vmatprep.subr.mxu0 0.0
    %361 = vmatpush1.msra.mxu0 0.0
    %362 = vmatprep.subr.mxu0 0.0
    %363 = vmatpush1.msra.mxu0 0.0
    %364 = vmatprep.subr.mxu0 0.0
    %365 = vmatpush1.msra.mxu0 0.0
    %366 = vmatprep.subr.mxu0 0.0
    %367 = vmatpush1.msra.mxu0 0.0
    %368 = vmatprep.subr.mxu0 0.0
    %369 = vmatpush1.msra.mxu0 0.0
    %370 = vmatprep.subr.mxu0 0.0
    %371 = vmatpush1.msra.mxu0 0.0
    %372 = vmatprep.mubr.f32.mxu0 0.0
    %373 = vmatmul.mubr.f32.gmra.mrb[0].mxu0 %v306
    %v374 = vpop.f32.mrb[0].mxu0
    %v375 = vadd.f32 %v160, %v374
    %v376 = vpop.f32.mrb[0].mxu0
    %v377 = vadd.f32 %v162, %v376
    %378 = vdwg.mxu0
    %379 = vmatprep.subr.mxu0 %v56
    %380 = vmatpush1.msra.mxu0 %v55
    %381 = vmatprep.subr.mxu0 %v61
    %382 = vmatpush1.msra.mxu0 %v60
    %383 = vmatprep.subr.mxu0 %v66
    %384 = vmatpush1.msra.mxu0 %v65
    %385 = vmatprep.subr.mxu0 %v71
    %386 = vmatpush1.msra.mxu0 %v70
    %387 = vmatprep.subr.mxu0 %v76
    %388 = vmatpush1.msra.mxu0 %v75
    %389 = vmatprep.subr.mxu0 %v81
    %390 = vmatpush1.msra.mxu0 %v80
    %391 = vmatprep.subr.mxu0 0.0
    %392 = vmatpush1.msra.mxu0 0.0
    %393 = vmatprep.subr.mxu0 0.0
    %394 = vmatpush1.msra.mxu0 0.0
    %395 = vmatprep.subr.mxu0 0.0
    %396 = vmatpush1.msra.mxu0 0.0
    %397 = vmatprep.subr.mxu0 0.0
    %398 = vmatpush1.msra.mxu0 0.0
    %399 = vmatprep.subr.mxu0 0.0
    %400 = vmatpush1.msra.mxu0 0.0
    %401 = vmatprep.subr.mxu0 0.0
    %402 = vmatpush1.msra.mxu0 0.0
    %403 = vmatprep.subr.mxu0 0.0
    %404 = vmatpush1.msra.mxu0 0.0
    %405 = vmatprep.subr.mxu0 0.0
    %406 = vmatpush1.msra.mxu0 0.0
    %407 = vmatprep.subr.mxu0 0.0
    %408 = vmatpush1.msra.mxu0 0.0
    %409 = vmatprep.subr.mxu0 0.0
    %410 = vmatpush1.msra.mxu0 0.0
    %411 = vmatprep.subr.mxu0 0.0
    %412 = vmatpush1.msra.mxu0 0.0
    %413 = vmatprep.subr.mxu0 0.0
    %414 = vmatpush1.msra.mxu0 0.0
    %415 = vmatprep.subr.mxu0 0.0
    %416 = vmatpush1.msra.mxu0 0.0
    %417 = vmatprep.subr.mxu0 0.0
    %418 = vmatpush1.msra.mxu0 0.0
    %419 = vmatprep.subr.mxu0 0.0
    %420 = vmatpush1.msra.mxu0 0.0
    %421 = vmatprep.subr.mxu0 0.0
    %422 = vmatpush1.msra.mxu0 0.0
    %423 = vmatprep.subr.mxu0 0.0
    %424 = vmatpush1.msra.mxu0 0.0
    %425 = vmatprep.subr.mxu0 0.0
    %426 = vmatpush1.msra.mxu0 0.0
    %427 = vmatprep.subr.mxu0 0.0
    %428 = vmatpush1.msra.mxu0 0.0
    %429 = vmatprep.subr.mxu0 0.0
    %430 = vmatpush1.msra.mxu0 0.0
    %431 = vmatprep.subr.mxu0 0.0
    %432 = vmatpush1.msra.mxu0 0.0
    %433 = vmatprep.subr.mxu0 0.0
    %434 = vmatpush1.msra.mxu0 0.0
    %435 = vmatprep.subr.mxu0 0.0
    %436 = vmatpush1.msra.mxu0 0.0
    %437 = vmatprep.subr.mxu0 0.0
    %438 = vmatpush1.msra.mxu0 0.0
    %439 = vmatprep.subr.mxu0 0.0
    %440 = vmatpush1.msra.mxu0 0.0
    %441 = vmatprep.subr.mxu0 0.0
    %442 = vmatpush1.msra.mxu0 0.0
    %443 = vmatprep.mubr.f32.mxu0 0.0
    %444 = vmatmul.mubr.f32.gmra.mrb[0].mxu0 %v306
    %v445 = vpop.f32.mrb[0].mxu0
    %v446 = vadd.f32 %v231, %v445
    %v447 = vpop.f32.mrb[0].mxu0
    %v448 = vadd.f32 %v233, %v447
    %449 = vdwg.mxu0
    %450 = vmatprep.subr.mxu0 0.0
    %451 = vmatpush1.msra.mxu0 %v57
    %452 = vmatprep.subr.mxu0 0.0
    %453 = vmatpush1.msra.mxu0 %v62
    %454 = vmatprep.subr.mxu0 0.0
    %455 = vmatpush1.msra.mxu0 %v67
    %456 = vmatprep.subr.mxu0 0.0
    %457 = vmatpush1.msra.mxu0 %v72
    %458 = vmatprep.subr.mxu0 0.0
    %459 = vmatpush1.msra.mxu0 %v77
    %460 = vmatprep.subr.mxu0 0.0
    %461 = vmatpush1.msra.mxu0 %v82
    %462 = vmatprep.subr.mxu0 0.0
    %463 = vmatpush1.msra.mxu0 0.0
    %464 = vmatprep.subr.mxu0 0.0
    %465 = vmatpush1.msra.mxu0 0.0
    %466 = vmatprep.subr.mxu0 0.0
    %467 = vmatpush1.msra.mxu0 0.0
    %468 = vmatprep.subr.mxu0 0.0
    %469 = vmatpush1.msra.mxu0 0.0
    %470 = vmatprep.subr.mxu0 0.0
    %471 = vmatpush1.msra.mxu0 0.0
    %472 = vmatprep.subr.mxu0 0.0
    %473 = vmatpush1.msra.mxu0 0.0
    %474 = vmatprep.subr.mxu0 0.0
    %475 = vmatpush1.msra.mxu0 0.0
    %476 = vmatprep.subr.mxu0 0.0
    %477 = vmatpush1.msra.mxu0 0.0
    %478 = vmatprep.subr.mxu0 0.0
    %479 = vmatpush1.msra.mxu0 0.0
    %480 = vmatprep.subr.mxu0 0.0
    %481 = vmatpush1.msra.mxu0 0.0
    %482 = vmatprep.subr.mxu0 0.0
    %483 = vmatpush1.msra.mxu0 0.0
    %484 = vmatprep.subr.mxu0 0.0
    %485 = vmatpush1.msra.mxu0 0.0
    %486 = vmatprep.subr.mxu0 0.0
    %487 = vmatpush1.msra.mxu0 0.0
    %488 = vmatprep.subr.mxu0 0.0
    %489 = vmatpush1.msra.mxu0 0.0
    %490 = vmatprep.subr.mxu0 0.0
    %491 = vmatpush1.msra.mxu0 0.0
    %492 = vmatprep.subr.mxu0 0.0
    %493 = vmatpush1.msra.mxu0 0.0
    %494 = vmatprep.subr.mxu0 0.0
    %495 = vmatpush1.msra.mxu0 0.0
    %496 = vmatprep.subr.mxu0 0.0
    %497 = vmatpush1.msra.mxu0 0.0
    %498 = vmatprep.subr.mxu0 0.0
    %499 = vmatpush1.msra.mxu0 0.0
    %500 = vmatprep.subr.mxu0 0.0
    %501 = vmatpush1.msra.mxu0 0.0
    %502 = vmatprep.subr.mxu0 0.0
    %503 = vmatpush1.msra.mxu0 0.0
    %504 = vmatprep.subr.mxu0 0.0
    %505 = vmatpush1.msra.mxu0 0.0
    %506 = vmatprep.subr.mxu0 0.0
    %507 = vmatpush1.msra.mxu0 0.0
    %508 = vmatprep.subr.mxu0 0.0
    %509 = vmatpush1.msra.mxu0 0.0
    %510 = vmatprep.subr.mxu0 0.0
    %511 = vmatpush1.msra.mxu0 0.0
    %512 = vmatprep.subr.mxu0 0.0
    %513 = vmatpush1.msra.mxu0 0.0
    %514 = vmatprep.mubr.f32.mxu0 0.0
    %515 = vmatmul.mubr.f32.gmra.mrb[0].mxu0 %v306
    %v516 = vpop.f32.mrb[0].mxu0
    %v517 = vadd.f32 %v302, %v516
    %v518 = vpop.f32.mrb[0].mxu0
    %519 = vdwg.mxu0
    %v521 = vsel %vm89, %v84, 0
    %523 = vmatprep.subr.mxu0 %v54
    %524 = vmatpush1.msra.mxu0 %v53
    %525 = vmatprep.subr.mxu0 %v59
    %526 = vmatpush1.msra.mxu0 %v58
    %527 = vmatprep.subr.mxu0 %v64
    %528 = vmatpush1.msra.mxu0 %v63
    %529 = vmatprep.subr.mxu0 %v69
    %530 = vmatpush1.msra.mxu0 %v68
    %531 = vmatprep.subr.mxu0 %v74
    %532 = vmatpush1.msra.mxu0 %v73
    %533 = vmatprep.subr.mxu0 %v79
    %534 = vmatpush1.msra.mxu0 %v78
    %535 = vmatprep.subr.mxu0 0.0
    %536 = vmatpush1.msra.mxu0 0.0
    %537 = vmatprep.subr.mxu0 0.0
    %538 = vmatpush1.msra.mxu0 0.0
    %539 = vmatprep.subr.mxu0 0.0
    %540 = vmatpush1.msra.mxu0 0.0
    %541 = vmatprep.subr.mxu0 0.0
    %542 = vmatpush1.msra.mxu0 0.0
    %543 = vmatprep.subr.mxu0 0.0
    %544 = vmatpush1.msra.mxu0 0.0
    %545 = vmatprep.subr.mxu0 0.0
    %546 = vmatpush1.msra.mxu0 0.0
    %547 = vmatprep.subr.mxu0 0.0
    %548 = vmatpush1.msra.mxu0 0.0
    %549 = vmatprep.subr.mxu0 0.0
    %550 = vmatpush1.msra.mxu0 0.0
    %551 = vmatprep.subr.mxu0 0.0
    %552 = vmatpush1.msra.mxu0 0.0
    %553 = vmatprep.subr.mxu0 0.0
    %554 = vmatpush1.msra.mxu0 0.0
    %555 = vmatprep.subr.mxu0 0.0
    %556 = vmatpush1.msra.mxu0 0.0
    %557 = vmatprep.subr.mxu0 0.0
    %558 = vmatpush1.msra.mxu0 0.0
    %559 = vmatprep.subr.mxu0 0.0
    %560 = vmatpush1.msra.mxu0 0.0
    %561 = vmatprep.subr.mxu0 0.0
    %562 = vmatpush1.msra.mxu0 0.0
    %563 = vmatprep.subr.mxu0 0.0
    %564 = vmatpush1.msra.mxu0 0.0
    %565 = vmatprep.subr.mxu0 0.0
    %566 = vmatpush1.msra.mxu0 0.0
    %567 = vmatprep.subr.mxu0 0.0
    %568 = vmatpush1.msra.mxu0 0.0
    %569 = vmatprep.subr.mxu0 0.0
    %570 = vmatpush1.msra.mxu0 0.0
    %571 = vmatprep.subr.mxu0 0.0
    %572 = vmatpush1.msra.mxu0 0.0
    %573 = vmatprep.subr.mxu0 0.0
    %574 = vmatpush1.msra.mxu0 0.0
    %575 = vmatprep.subr.mxu0 0.0
    %576 = vmatpush1.msra.mxu0 0.0
    %577 = vmatprep.subr.mxu0 0.0
    %578 = vmatpush1.msra.mxu0 0.0
    %579 = vmatprep.subr.mxu0 0.0
    %580 = vmatpush1.msra.mxu0 0.0
    %581 = vmatprep.subr.mxu0 0.0
    %582 = vmatpush1.msra.mxu0 0.0
    %583 = vmatprep.subr.mxu0 0.0
    %584 = vmatpush1.msra.mxu0 0.0
    %585 = vmatprep.subr.mxu0 0.0
    %586 = vmatpush1.msra.mxu0 0.0
    %587 = vmatprep.mubr.f32.mxu0 0.0
    %588 = vmatmul.mubr.f32.gmra.mrb[0].mxu0 %v521
    %v589 = vpop.f32.mrb[0].mxu0
    %v590 = vadd.f32 0.0, %v589
    %v591 = vpop.f32.mrb[0].mxu0
    %v592 = vadd.f32 0.0, %v591
    %593 = vdwg.mxu0
    %594 = vmatprep.subr.mxu0 %v56
    %595 = vmatpush1.msra.mxu0 %v55
    %596 = vmatprep.subr.mxu0 %v61
    %597 = vmatpush1.msra.mxu0 %v60
    %598 = vmatprep.subr.mxu0 %v66
    %599 = vmatpush1.msra.mxu0 %v65
    %600 = vmatprep.subr.mxu0 %v71
    %601 = vmatpush1.msra.mxu0 %v70
    %602 = vmatprep.subr.mxu0 %v76
    %603 = vmatpush1.msra.mxu0 %v75
    %604 = vmatprep.subr.mxu0 %v81
    %605 = vmatpush1.msra.mxu0 %v80
    %606 = vmatprep.subr.mxu0 0.0
    %607 = vmatpush1.msra.mxu0 0.0
    %608 = vmatprep.subr.mxu0 0.0
    %609 = vmatpush1.msra.mxu0 0.0
    %610 = vmatprep.subr.mxu0 0.0
    %611 = vmatpush1.msra.mxu0 0.0
    %612 = vmatprep.subr.mxu0 0.0
    %613 = vmatpush1.msra.mxu0 0.0
    %614 = vmatprep.subr.mxu0 0.0
    %615 = vmatpush1.msra.mxu0 0.0
    %616 = vmatprep.subr.mxu0 0.0
    %617 = vmatpush1.msra.mxu0 0.0
    %618 = vmatprep.subr.mxu0 0.0
    %619 = vmatpush1.msra.mxu0 0.0
    %620 = vmatprep.subr.mxu0 0.0
    %621 = vmatpush1.msra.mxu0 0.0
    %622 = vmatprep.subr.mxu0 0.0
    %623 = vmatpush1.msra.mxu0 0.0
    %624 = vmatprep.subr.mxu0 0.0
    %625 = vmatpush1.msra.mxu0 0.0
    %626 = vmatprep.subr.mxu0 0.0
    %627 = vmatpush1.msra.mxu0 0.0
    %628 = vmatprep.subr.mxu0 0.0
    %629 = vmatpush1.msra.mxu0 0.0
    %630 = vmatprep.subr.mxu0 0.0
    %631 = vmatpush1.msra.mxu0 0.0
    %632 = vmatprep.subr.mxu0 0.0
    %633 = vmatpush1.msra.mxu0 0.0
    %634 = vmatprep.subr.mxu0 0.0
    %635 = vmatpush1.msra.mxu0 0.0
    %636 = vmatprep.subr.mxu0 0.0
    %637 = vmatpush1.msra.mxu0 0.0
    %638 = vmatprep.subr.mxu0 0.0
    %639 = vmatpush1.msra.mxu0 0.0
    %640 = vmatprep.subr.mxu0 0.0
    %641 = vmatpush1.msra.mxu0 0.0
    %642 = vmatprep.subr.mxu0 0.0
    %643 = vmatpush1.msra.mxu0 0.0
    %644 = vmatprep.subr.mxu0 0.0
    %645 = vmatpush1.msra.mxu0 0.0
    %646 = vmatprep.subr.mxu0 0.0
    %647 = vmatpush1.msra.mxu0 0.0
    %648 = vmatprep.subr.mxu0 0.0
    %649 = vmatpush1.msra.mxu0 0.0
    %650 = vmatprep.subr.mxu0 0.0
    %651 = vmatpush1.msra.mxu0 0.0
    %652 = vmatprep.subr.mxu0 0.0
    %653 = vmatpush1.msra.mxu0 0.0
    %654 = vmatprep.subr.mxu0 0.0
    %655 = vmatpush1.msra.mxu0 0.0
    %656 = vmatprep.subr.mxu0 0.0
    %657 = vmatpush1.msra.mxu0 0.0
    %658 = vmatprep.mubr.f32.mxu0 0.0
    %659 = vmatmul.mubr.f32.gmra.mrb[0].mxu0 %v521
    %v660 = vpop.f32.mrb[0].mxu0
    %v661 = vadd.f32 0.0, %v660
    %v662 = vpop.f32.mrb[0].mxu0
    %v663 = vadd.f32 0.0, %v662
    %664 = vdwg.mxu0
    %665 = vmatprep.subr.mxu0 0.0
    %666 = vmatpush1.msra.mxu0 %v57
    %667 = vmatprep.subr.mxu0 0.0
    %668 = vmatpush1.msra.mxu0 %v62
    %669 = vmatprep.subr.mxu0 0.0
    %670 = vmatpush1.msra.mxu0 %v67
    %671 = vmatprep.subr.mxu0 0.0
    %672 = vmatpush1.msra.mxu0 %v72
    %673 = vmatprep.subr.mxu0 0.0
    %674 = vmatpush1.msra.mxu0 %v77
    %675 = vmatprep.subr.mxu0 0.0
    %676 = vmatpush1.msra.mxu0 %v82
    %677 = vmatprep.subr.mxu0 0.0
    %678 = vmatpush1.msra.mxu0 0.0
    %679 = vmatprep.subr.mxu0 0.0
    %680 = vmatpush1.msra.mxu0 0.0
    %681 = vmatprep.subr.mxu0 0.0
    %682 = vmatpush1.msra.mxu0 0.0
    %683 = vmatprep.subr.mxu0 0.0
    %684 = vmatpush1.msra.mxu0 0.0
    %685 = vmatprep.subr.mxu0 0.0
    %686 = vmatpush1.msra.mxu0 0.0
    %687 = vmatprep.subr.mxu0 0.0
    %688 = vmatpush1.msra.mxu0 0.0
    %689 = vmatprep.subr.mxu0 0.0
    %690 = vmatpush1.msra.mxu0 0.0
    %691 = vmatprep.subr.mxu0 0.0
    %692 = vmatpush1.msra.mxu0 0.0
    %693 = vmatprep.subr.mxu0 0.0
    %694 = vmatpush1.msra.mxu0 0.0
    %695 = vmatprep.subr.mxu0 0.0
    %696 = vmatpush1.msra.mxu0 0.0
    %697 = vmatprep.subr.mxu0 0.0
    %698 = vmatpush1.msra.mxu0 0.0
    %699 = vmatprep.subr.mxu0 0.0
    %700 = vmatpush1.msra.mxu0 0.0
    %701 = vmatprep.subr.mxu0 0.0
    %702 = vmatpush1.msra.mxu0 0.0
    %703 = vmatprep.subr.mxu0 0.0
    %704 = vmatpush1.msra.mxu0 0.0
    %705 = vmatprep.subr.mxu0 0.0
    %706 = vmatpush1.msra.mxu0 0.0
    %707 = vmatprep.subr.mxu0 0.0
    %708 = vmatpush1.msra.mxu0 0.0
    %709 = vmatprep.subr.mxu0 0.0
    %710 = vmatpush1.msra.mxu0 0.0
    %711 = vmatprep.subr.mxu0 0.0
    %712 = vmatpush1.msra.mxu0 0.0
    %713 = vmatprep.subr.mxu0 0.0
    %714 = vmatpush1.msra.mxu0 0.0
    %715 = vmatprep.subr.mxu0 0.0
    %716 = vmatpush1.msra.mxu0 0.0
    %717 = vmatprep.subr.mxu0 0.0
    %718 = vmatpush1.msra.mxu0 0.0
    %719 = vmatprep.subr.mxu0 0.0
    %720 = vmatpush1.msra.mxu0 0.0
    %721 = vmatprep.subr.mxu0 0.0
    %722 = vmatpush1.msra.mxu0 0.0
    %723 = vmatprep.subr.mxu0 0.0
    %724 = vmatpush1.msra.mxu0 0.0
    %725 = vmatprep.subr.mxu0 0.0
    %726 = vmatpush1.msra.mxu0 0.0
    %727 = vmatprep.subr.mxu0 0.0
    %728 = vmatpush1.msra.mxu0 0.0
    %729 = vmatprep.mubr.f32.mxu0 0.0
    %730 = vmatmul.mubr.f32.gmra.mrb[0].mxu0 %v521
    %v731 = vpop.f32.mrb[0].mxu0
    %v732 = vadd.f32 0.0, %v731
    %v733 = vpop.f32.mrb[0].mxu0
    %734 = vdwg.mxu0
    %v735 = vadd.f32 %v375, %v590
    %v736 = vadd.f32 %v377, %v592
    %v737 = vadd.f32 %v446, %v661
    %v738 = vadd.f32 %v448, %v663
    %v739 = vadd.f32 %v517, %v732
    %v740 = vld [vmem:[#allocation5] ss:$8 sm:$0xf]
    %v741 = vld [vmem:[#allocation5] ss:$8 sm:$0x10]
    %v742 = vor.u32 %v740, %v741
    %s743 = scalar_lea.vmem [#allocation5], 1
    %v744 = vld [vmem:[%s743] ss:$8 sm:$0xf]
    %v745 = vld [vmem:[%s743] ss:$8 sm:$0x10]
    %v746 = vor.u32 %v744, %v745
    %s747 = scalar_lea.vmem [#allocation5], 2
    %v748 = vld [vmem:[%s747] ss:$8 sm:$0xf]
    %v749 = vld [vmem:[%s747] ss:$8 sm:$0x10]
    %v750 = vor.u32 %v748, %v749
    %s751 = scalar_lea.vmem [#allocation5], 3
    %v752 = vld [vmem:[%s751] ss:$8 sm:$0xf]
    %v753 = vld [vmem:[%s751] ss:$8 sm:$0x10]
    %v754 = vor.u32 %v752, %v753
    %v756 = vlaneseq
    %v757 = vshrl.u32 %v756, 7
    %v758 = vsub.s32 0, %v757
    %v759 = vrot.slane %v742, %v758
    %v760 = vlaneseq
    %v761 = vshrl.u32 %v760, 7
    %v762 = vsub.s32 1, %v761
    %v763 = vrot.slane %v742, %v762
    %v764 = vlaneseq
    %v765 = vshrl.u32 %v764, 7
    %v766 = vsub.s32 2, %v765
    %v767 = vrot.slane %v742, %v766
    %v768 = vlaneseq
    %v769 = vshrl.u32 %v768, 7
    %v770 = vsub.s32 3, %v769
    %v771 = vrot.slane %v742, %v770
    %v772 = vlaneseq
    %v773 = vshrl.u32 %v772, 7
    %v774 = vsub.s32 4, %v773
    %v775 = vrot.slane %v742, %v774
    %v781 = vmul.f32 %v735, %v759
    %v782 = vmul.f32 %v736, %v763
    %v783 = vmul.f32 %v737, %v767
    %v784 = vmul.f32 %v738, %v771
    %v785 = vmul.f32 %v739, %v775
    %v787 = vlaneseq
    %v788 = vshrl.u32 %v787, 7
    %v789 = vsub.s32 0, %v788
    %v790 = vrot.slane %v746, %v789
    %v791 = vlaneseq
    %v792 = vshrl.u32 %v791, 7
    %v793 = vsub.s32 1, %v792
    %v794 = vrot.slane %v746, %v793
    %v795 = vlaneseq
    %v796 = vshrl.u32 %v795, 7
    %v797 = vsub.s32 2, %v796
    %v798 = vrot.slane %v746, %v797
    %v799 = vlaneseq
    %v800 = vshrl.u32 %v799, 7
    %v801 = vsub.s32 3, %v800
    %v802 = vrot.slane %v746, %v801
    %v803 = vlaneseq
    %v804 = vshrl.u32 %v803, 7
    %v805 = vsub.s32 4, %v804
    %v806 = vrot.slane %v746, %v805
    %v812 = vadd.f32 %v781, %v790
    %v813 = vadd.f32 %v782, %v794
    %v814 = vadd.f32 %v783, %v798
    %v815 = vadd.f32 %v784, %v802
    %v816 = vadd.f32 %v785, %v806
    %v817 = vand.u32 2147483647, %v812
    %vm818 = vcmp.le.f32.partialorder %v817, 0.7853982
    %vm819 = vcmp.lt.s32.totalorder %v812, 0
    %v820 = vand.u32 %v812, 2139095040
    %v821 = vshrl.u32 %v820, 23
    %v822 = vsub.s32 %v821, 127
    %v823 = vand.u32 2147483647, %v812
    %v824 = vand.u32 %v823, 8388607
    %v825 = vor.u32 %v824, 8388608
    %v826 = vsub.s32 0, %v825
    %v827 = vadd.s32 %v822, 1
    %vm828 = vcmp.gt.s32.totalorder %v827, 0
    %v829 = vsel %vm828, %v827, 0
    %v830 = vshrl.u32 %v829, 5
    %v831 = vand.u32 %v829, 31
    %v832 = vsub.s32 32, %v831
    %v833 = vshrl.u32 683565275, %v832
    %v834 = vshll.u32 683565275, %v831
    %v835 = vshrl.u32 2475754826, %v832
    %v836 = vor.u32 %v834, %v835
    %v837 = vshll.u32 2475754826, %v831
    %v838 = vshrl.u32 2131351028, %v832
    %v839 = vor.u32 %v837, %v838
    %v840 = vshll.u32 2131351028, %v831
    %v841 = vshrl.u32 2102212464, %v832
    %v842 = vor.u32 %v840, %v841
    %v843 = vshll.u32 2102212464, %v831
    %v844 = vshrl.u32 920167782, %v832
    %v845 = vor.u32 %v843, %v844
    %v846 = vshll.u32 920167782, %v831
    %v847 = vshrl.u32 1326507024, %v832
    %v848 = vor.u32 %v846, %v847
    %vm849 = vcmp.lt.s32.totalorder %v830, 1
    %vm850 = vcmp.lt.s32.totalorder %v830, 2
    %vm851 = vcmp.lt.s32.totalorder %v830, 3
    %vm852 = vcmp.lt.s32.totalorder %v830, 4
    %v853 = vsel %vm849, %v833, %v836
    %v854 = vsel %vm852, %v842, 2102212464
    %v855 = vsel %vm851, %v839, %v854
    %v856 = vsel %vm850, %v853, %v855
    %v857 = vsel %vm849, %v836, %v839
    %v858 = vsel %vm852, %v845, 920167782
    %v859 = vsel %vm851, %v842, %v858
    %v860 = vsel %vm850, %v857, %v859
    %v861 = vsel %vm849, %v839, %v842
    %v862 = vsel %vm852, %v848, 1326507024
    %v863 = vsel %vm851, %v845, %v862
    %v864 = vsel %vm850, %v861, %v863
    %v865 = vshll.u32 %v825, 8
    %v866 = vmul.u32.u64.compose %v865, %v864
    %v867 = vextract.low.u32 %v866
    %v868 = vextract.high.u32 %v866
    %v869 = vmul.u32.u64.compose %v865, %v860
    %v870 = vextract.low.u32 %v869
    %v871 = vextract.high.u32 %v869
    %v872 = vmul.u32 %v865, %v856
    %v873 = vadd.s32 %v868, %v870
    %vm874 = vc.u32 %v868, %v870
    %v875 = vadd.s32 %v871, 1
    %v876 = vsel %vm874, %v875, %v871
    %v877 = vadd.s32 %v872, %v876
    %v878 = vadd.s32 %v877, 536870912
    %v879 = vshrl.u32 %v878, 30
    %v880 = vshll.u32 %v879, 30
    %v881 = vsub.s32 %v877, %v880
    %vm882 = vcmp.lt.s32.totalorder %v881, 0
    %v883 = vsub.s32 0, %v881
    %v884 = vsel %vm882, %v883, %v881
    %v885 = vclz %v884
    %v886 = vsub.s32 %v885, 2
    %vm887 = vcmp.gt.s32.totalorder 0, %v886
    %v888 = vsel %vm887, 0, %v886
    %v889 = vsub.s32 32, %v888
    %v890 = vshll.u32 %v881, %v888
    %v891 = vshrl.u32 %v873, %v889
    %v892 = vor.u32 %v890, %v891
    %v893 = vsub.s32 4294967266, %v888
    %v894 = vadd.s32 %v893, 127
    %v895 = vshll.u32 %v894, 23
    %v896 = vor.u32 4788187, %v895
    %v897 = vand.u32 2147483647, %v896
    %v899 = vcvt.s32.f32 %v892
    %v900 = vmul.f32 %v899, %v897
    %v901 = vxor.u32 %v900, 2147483648
    %v902 = vsel %vm819, %v901, %v900
    %v903 = vsub.s32 4, %v879
    %v904 = vsel %vm819, %v903, %v879
    %v905 = vsel %vm818, %v812, %v902
    %v906 = vsel %vm818, 0, %v904
    %v907 = vcosq.f32.pop %v905
    %v908 = vsinq.f32.pop %v905
    %vm909 = vweird.f32 %v812
    %v910 = vadd.s32 %v906, 3
    %v911 = vand.u32 %v910, 3
    %vm912 = vcmp.lt.s32.totalorder %v911, 2
    %vm913 = vcmp.eq.s32.totalorder %v911, 0
    %v914 = vxor.u32 %v908, 2147483648
    %v915 = vsel %vm913, %v907, %v914
    %vm916 = vcmp.eq.s32.totalorder %v911, 2
    %v917 = vxor.u32 %v907, 2147483648
    %v918 = vsel %vm916, %v917, %v908
    %v919 = vsel %vm912, %v915, %v918
    %v920 = vsel %vm909, nan, %v919
    %v921 = vand.u32 2147483647, %v813
    %vm922 = vcmp.le.f32.partialorder %v921, 0.7853982
    %vm923 = vcmp.lt.s32.totalorder %v813, 0
    %v924 = vand.u32 %v813, 2139095040
    %v925 = vshrl.u32 %v924, 23
    %v926 = vsub.s32 %v925, 127
    %v927 = vand.u32 2147483647, %v813
    %v928 = vand.u32 %v927, 8388607
    %v929 = vor.u32 %v928, 8388608
    %v930 = vsub.s32 0, %v929
    %v931 = vadd.s32 %v926, 1
    %vm932 = vcmp.gt.s32.totalorder %v931, 0
    %v933 = vsel %vm932, %v931, 0
    %v934 = vshrl.u32 %v933, 5
    %v935 = vand.u32 %v933, 31
    %v936 = vsub.s32 32, %v935
    %v937 = vshrl.u32 683565275, %v936
    %v938 = vshll.u32 683565275, %v935
    %v939 = vshrl.u32 2475754826, %v936
    %v940 = vor.u32 %v938, %v939
    %v941 = vshll.u32 2475754826, %v935
    %v942 = vshrl.u32 2131351028, %v936
    %v943 = vor.u32 %v941, %v942
    %v944 = vshll.u32 2131351028, %v935
    %v945 = vshrl.u32 2102212464, %v936
    %v946 = vor.u32 %v944, %v945
    %v947 = vshll.u32 2102212464, %v935
    %v948 = vshrl.u32 920167782, %v936
    %v949 = vor.u32 %v947, %v948
    %v950 = vshll.u32 920167782, %v935
    %v951 = vshrl.u32 1326507024, %v936
    %v952 = vor.u32 %v950, %v951
    %vm953 = vcmp.lt.s32.totalorder %v934, 1
    %vm954 = vcmp.lt.s32.totalorder %v934, 2
    %vm955 = vcmp.lt.s32.totalorder %v934, 3
    %vm956 = vcmp.lt.s32.totalorder %v934, 4
    %v957 = vsel %vm953, %v937, %v940
    %v958 = vsel %vm956, %v946, 2102212464
    %v959 = vsel %vm955, %v943, %v958
    %v960 = vsel %vm954, %v957, %v959
    %v961 = vsel %vm953, %v940, %v943
    %v962 = vsel %vm956, %v949, 920167782
    %v963 = vsel %vm955, %v946, %v962
    %v964 = vsel %vm954, %v961, %v963
    %v965 = vsel %vm953, %v943, %v946
    %v966 = vsel %vm956, %v952, 1326507024
    %v967 = vsel %vm955, %v949, %v966
    %v968 = vsel %vm954, %v965, %v967
    %v969 = vshll.u32 %v929, 8
    %v970 = vmul.u32.u64.compose %v969, %v968
    %v971 = vextract.low.u32 %v970
    %v972 = vextract.high.u32 %v970
    %v973 = vmul.u32.u64.compose %v969, %v964
    %v974 = vextract.low.u32 %v973
    %v975 = vextract.high.u32 %v973
    %v976 = vmul.u32 %v969, %v960
    %v977 = vadd.s32 %v972, %v974
    %vm978 = vc.u32 %v972, %v974
    %v979 = vadd.s32 %v975, 1
    %v980 = vsel %vm978, %v979, %v975
    %v981 = vadd.s32 %v976, %v980
    %v982 = vadd.s32 %v981, 536870912
    %v983 = vshrl.u32 %v982, 30
    %v984 = vshll.u32 %v983, 30
    %v985 = vsub.s32 %v981, %v984
    %vm986 = vcmp.lt.s32.totalorder %v985, 0
    %v987 = vsub.s32 0, %v985
    %v988 = vsel %vm986, %v987, %v985
    %v989 = vclz %v988
    %v990 = vsub.s32 %v989, 2
    %vm991 = vcmp.gt.s32.totalorder 0, %v990
    %v992 = vsel %vm991, 0, %v990
    %v993 = vsub.s32 32, %v992
    %v994 = vshll.u32 %v985, %v992
    %v995 = vshrl.u32 %v977, %v993
    %v996 = vor.u32 %v994, %v995
    %v997 = vsub.s32 4294967266, %v992
    %v998 = vadd.s32 %v997, 127
    %v999 = vshll.u32 %v998, 23
    %v1000 = vor.u32 4788187, %v999
    %v1001 = vand.u32 2147483647, %v1000
    %v1003 = vcvt.s32.f32 %v996
    %v1004 = vmul.f32 %v1003, %v1001
    %v1005 = vxor.u32 %v1004, 2147483648
    %v1006 = vsel %vm923, %v1005, %v1004
    %v1007 = vsub.s32 4, %v983
    %v1008 = vsel %vm923, %v1007, %v983
    %v1009 = vsel %vm922, %v813, %v1006
    %v1010 = vsel %vm922, 0, %v1008
    %v1011 = vcosq.f32.pop %v1009
    %v1012 = vsinq.f32.pop %v1009
    %vm1013 = vweird.f32 %v813
    %v1014 = vadd.s32 %v1010, 3
    %v1015 = vand.u32 %v1014, 3
    %vm1016 = vcmp.lt.s32.totalorder %v1015, 2
    %vm1017 = vcmp.eq.s32.totalorder %v1015, 0
    %v1018 = vxor.u32 %v1012, 2147483648
    %v1019 = vsel %vm1017, %v1011, %v1018
    %vm1020 = vcmp.eq.s32.totalorder %v1015, 2
    %v1021 = vxor.u32 %v1011, 2147483648
    %v1022 = vsel %vm1020, %v1021, %v1012
    %v1023 = vsel %vm1016, %v1019, %v1022
    %v1024 = vsel %vm1013, nan, %v1023
    %v1025 = vand.u32 2147483647, %v814
    %vm1026 = vcmp.le.f32.partialorder %v1025, 0.7853982
    %vm1027 = vcmp.lt.s32.totalorder %v814, 0
    %v1028 = vand.u32 %v814, 2139095040
    %v1029 = vshrl.u32 %v1028, 23
    %v1030 = vsub.s32 %v1029, 127
    %v1031 = vand.u32 2147483647, %v814
    %v1032 = vand.u32 %v1031, 8388607
    %v1033 = vor.u32 %v1032, 8388608
    %v1034 = vsub.s32 0, %v1033
    %v1035 = vadd.s32 %v1030, 1
    %vm1036 = vcmp.gt.s32.totalorder %v1035, 0
    %v1037 = vsel %vm1036, %v1035, 0
    %v1038 = vshrl.u32 %v1037, 5
    %v1039 = vand.u32 %v1037, 31
    %v1040 = vsub.s32 32, %v1039
    %v1041 = vshrl.u32 683565275, %v1040
    %v1042 = vshll.u32 683565275, %v1039
    %v1043 = vshrl.u32 2475754826, %v1040
    %v1044 = vor.u32 %v1042, %v1043
    %v1045 = vshll.u32 2475754826, %v1039
    %v1046 = vshrl.u32 2131351028, %v1040
    %v1047 = vor.u32 %v1045, %v1046
    %v1048 = vshll.u32 2131351028, %v1039
    %v1049 = vshrl.u32 2102212464, %v1040
    %v1050 = vor.u32 %v1048, %v1049
    %v1051 = vshll.u32 2102212464, %v1039
    %v1052 = vshrl.u32 920167782, %v1040
    %v1053 = vor.u32 %v1051, %v1052
    %v1054 = vshll.u32 920167782, %v1039
    %v1055 = vshrl.u32 1326507024, %v1040
    %v1056 = vor.u32 %v1054, %v1055
    %vm1057 = vcmp.lt.s32.totalorder %v1038, 1
    %vm1058 = vcmp.lt.s32.totalorder %v1038, 2
    %vm1059 = vcmp.lt.s32.totalorder %v1038, 3
    %vm1060 = vcmp.lt.s32.totalorder %v1038, 4
    %v1061 = vsel %vm1057, %v1041, %v1044
    %v1062 = vsel %vm1060, %v1050, 2102212464
    %v1063 = vsel %vm1059, %v1047, %v1062
    %v1064 = vsel %vm1058, %v1061, %v1063
    %v1065 = vsel %vm1057, %v1044, %v1047
    %v1066 = vsel %vm1060, %v1053, 920167782
    %v1067 = vsel %vm1059, %v1050, %v1066
    %v1068 = vsel %vm1058, %v1065, %v1067
    %v1069 = vsel %vm1057, %v1047, %v1050
    %v1070 = vsel %vm1060, %v1056, 1326507024
    %v1071 = vsel %vm1059, %v1053, %v1070
    %v1072 = vsel %vm1058, %v1069, %v1071
    %v1073 = vshll.u32 %v1033, 8
    %v1074 = vmul.u32.u64.compose %v1073, %v1072
    %v1075 = vextract.low.u32 %v1074
    %v1076 = vextract.high.u32 %v1074
    %v1077 = vmul.u32.u64.compose %v1073, %v1068
    %v1078 = vextract.low.u32 %v1077
    %v1079 = vextract.high.u32 %v1077
    %v1080 = vmul.u32 %v1073, %v1064
    %v1081 = vadd.s32 %v1076, %v1078
    %vm1082 = vc.u32 %v1076, %v1078
    %v1083 = vadd.s32 %v1079, 1
    %v1084 = vsel %vm1082, %v1083, %v1079
    %v1085 = vadd.s32 %v1080, %v1084
    %v1086 = vadd.s32 %v1085, 536870912
    %v1087 = vshrl.u32 %v1086, 30
    %v1088 = vshll.u32 %v1087, 30
    %v1089 = vsub.s32 %v1085, %v1088
    %vm1090 = vcmp.lt.s32.totalorder %v1089, 0
    %v1091 = vsub.s32 0, %v1089
    %v1092 = vsel %vm1090, %v1091, %v1089
    %v1093 = vclz %v1092
    %v1094 = vsub.s32 %v1093, 2
    %vm1095 = vcmp.gt.s32.totalorder 0, %v1094
    %v1096 = vsel %vm1095, 0, %v1094
    %v1097 = vsub.s32 32, %v1096
    %v1098 = vshll.u32 %v1089, %v1096
    %v1099 = vshrl.u32 %v1081, %v1097
    %v1100 = vor.u32 %v1098, %v1099
    %v1101 = vsub.s32 4294967266, %v1096
    %v1102 = vadd.s32 %v1101, 127
    %v1103 = vshll.u32 %v1102, 23
    %v1104 = vor.u32 4788187, %v1103
    %v1105 = vand.u32 2147483647, %v1104
    %v1107 = vcvt.s32.f32 %v1100
    %v1108 = vmul.f32 %v1107, %v1105
    %v1109 = vxor.u32 %v1108, 2147483648
    %v1110 = vsel %vm1027, %v1109, %v1108
    %v1111 = vsub.s32 4, %v1087
    %v1112 = vsel %vm1027, %v1111, %v1087
    %v1113 = vsel %vm1026, %v814, %v1110
    %v1114 = vsel %vm1026, 0, %v1112
    %v1115 = vcosq.f32.pop %v1113
    %v1116 = vsinq.f32.pop %v1113
    %vm1117 = vweird.f32 %v814
    %v1118 = vadd.s32 %v1114, 3
    %v1119 = vand.u32 %v1118, 3
    %vm1120 = vcmp.lt.s32.totalorder %v1119, 2
    %vm1121 = vcmp.eq.s32.totalorder %v1119, 0
    %v1122 = vxor.u32 %v1116, 2147483648
    %v1123 = vsel %vm1121, %v1115, %v1122
    %vm1124 = vcmp.eq.s32.totalorder %v1119, 2
    %v1125 = vxor.u32 %v1115, 2147483648
    %v1126 = vsel %vm1124, %v1125, %v1116
    %v1127 = vsel %vm1120, %v1123, %v1126
    %v1128 = vsel %vm1117, nan, %v1127
    %v1129 = vand.u32 2147483647, %v815
    %vm1130 = vcmp.le.f32.partialorder %v1129, 0.7853982
    %vm1131 = vcmp.lt.s32.totalorder %v815, 0
    %v1132 = vand.u32 %v815, 2139095040
    %v1133 = vshrl.u32 %v1132, 23
    %v1134 = vsub.s32 %v1133, 127
    %v1135 = vand.u32 2147483647, %v815
    %v1136 = vand.u32 %v1135, 8388607
    %v1137 = vor.u32 %v1136, 8388608
    %v1138 = vsub.s32 0, %v1137
    %v1139 = vadd.s32 %v1134, 1
    %vm1140 = vcmp.gt.s32.totalorder %v1139, 0
    %v1141 = vsel %vm1140, %v1139, 0
    %v1142 = vshrl.u32 %v1141, 5
    %v1143 = vand.u32 %v1141, 31
    %v1144 = vsub.s32 32, %v1143
    %v1145 = vshrl.u32 683565275, %v1144
    %v1146 = vshll.u32 683565275, %v1143
    %v1147 = vshrl.u32 2475754826, %v1144
    %v1148 = vor.u32 %v1146, %v1147
    %v1149 = vshll.u32 2475754826, %v1143
    %v1150 = vshrl.u32 2131351028, %v1144
    %v1151 = vor.u32 %v1149, %v1150
    %v1152 = vshll.u32 2131351028, %v1143
    %v1153 = vshrl.u32 2102212464, %v1144
    %v1154 = vor.u32 %v1152, %v1153
    %v1155 = vshll.u32 2102212464, %v1143
    %v1156 = vshrl.u32 920167782, %v1144
    %v1157 = vor.u32 %v1155, %v1156
    %v1158 = vshll.u32 920167782, %v1143
    %v1159 = vshrl.u32 1326507024, %v1144
    %v1160 = vor.u32 %v1158, %v1159
    %vm1161 = vcmp.lt.s32.totalorder %v1142, 1
    %vm1162 = vcmp.lt.s32.totalorder %v1142, 2
    %vm1163 = vcmp.lt.s32.totalorder %v1142, 3
    %vm1164 = vcmp.lt.s32.totalorder %v1142, 4
    %v1165 = vsel %vm1161, %v1145, %v1148
    %v1166 = vsel %vm1164, %v1154, 2102212464
    %v1167 = vsel %vm1163, %v1151, %v1166
    %v1168 = vsel %vm1162, %v1165, %v1167
    %v1169 = vsel %vm1161, %v1148, %v1151
    %v1170 = vsel %vm1164, %v1157, 920167782
    %v1171 = vsel %vm1163, %v1154, %v1170
    %v1172 = vsel %vm1162, %v1169, %v1171
    %v1173 = vsel %vm1161, %v1151, %v1154
    %v1174 = vsel %vm1164, %v1160, 1326507024
    %v1175 = vsel %vm1163, %v1157, %v1174
    %v1176 = vsel %vm1162, %v1173, %v1175
    %v1177 = vshll.u32 %v1137, 8
    %v1178 = vmul.u32.u64.compose %v1177, %v1176
    %v1179 = vextract.low.u32 %v1178
    %v1180 = vextract.high.u32 %v1178
    %v1181 = vmul.u32.u64.compose %v1177, %v1172
    %v1182 = vextract.low.u32 %v1181
    %v1183 = vextract.high.u32 %v1181
    %v1184 = vmul.u32 %v1177, %v1168
    %v1185 = vadd.s32 %v1180, %v1182
    %vm1186 = vc.u32 %v1180, %v1182
    %v1187 = vadd.s32 %v1183, 1
    %v1188 = vsel %vm1186, %v1187, %v1183
    %v1189 = vadd.s32 %v1184, %v1188
    %v1190 = vadd.s32 %v1189, 536870912
    %v1191 = vshrl.u32 %v1190, 30
    %v1192 = vshll.u32 %v1191, 30
    %v1193 = vsub.s32 %v1189, %v1192
    %vm1194 = vcmp.lt.s32.totalorder %v1193, 0
    %v1195 = vsub.s32 0, %v1193
    %v1196 = vsel %vm1194, %v1195, %v1193
    %v1197 = vclz %v1196
    %v1198 = vsub.s32 %v1197, 2
    %vm1199 = vcmp.gt.s32.totalorder 0, %v1198
    %v1200 = vsel %vm1199, 0, %v1198
    %v1201 = vsub.s32 32, %v1200
    %v1202 = vshll.u32 %v1193, %v1200
    %v1203 = vshrl.u32 %v1185, %v1201
    %v1204 = vor.u32 %v1202, %v1203
    %v1205 = vsub.s32 4294967266, %v1200
    %v1206 = vadd.s32 %v1205, 127
    %v1207 = vshll.u32 %v1206, 23
    %v1208 = vor.u32 4788187, %v1207
    %v1209 = vand.u32 2147483647, %v1208
    %v1211 = vcvt.s32.f32 %v1204
    %v1212 = vmul.f32 %v1211, %v1209
    %v1213 = vxor.u32 %v1212, 2147483648
    %v1214 = vsel %vm1131, %v1213, %v1212
    %v1215 = vsub.s32 4, %v1191
    %v1216 = vsel %vm1131, %v1215, %v1191
    %v1217 = vsel %vm1130, %v815, %v1214
    %v1218 = vsel %vm1130, 0, %v1216
    %v1219 = vcosq.f32.pop %v1217
    %v1220 = vsinq.f32.pop %v1217
    %vm1221 = vweird.f32 %v815
    %v1222 = vadd.s32 %v1218, 3
    %v1223 = vand.u32 %v1222, 3
    %vm1224 = vcmp.lt.s32.totalorder %v1223, 2
    %vm1225 = vcmp.eq.s32.totalorder %v1223, 0
    %v1226 = vxor.u32 %v1220, 2147483648
    %v1227 = vsel %vm1225, %v1219, %v1226
    %vm1228 = vcmp.eq.s32.totalorder %v1223, 2
    %v1229 = vxor.u32 %v1219, 2147483648
    %v1230 = vsel %vm1228, %v1229, %v1220
    %v1231 = vsel %vm1224, %v1227, %v1230
    %v1232 = vsel %vm1221, nan, %v1231
    %v1233 = vand.u32 2147483647, %v816
    %vm1234 = vcmp.le.f32.partialorder %v1233, 0.7853982
    %vm1235 = vcmp.lt.s32.totalorder %v816, 0
    %v1236 = vand.u32 %v816, 2139095040
    %v1237 = vshrl.u32 %v1236, 23
    %v1238 = vsub.s32 %v1237, 127
    %v1239 = vand.u32 2147483647, %v816
    %v1240 = vand.u32 %v1239, 8388607
    %v1241 = vor.u32 %v1240, 8388608
    %v1242 = vsub.s32 0, %v1241
    %v1243 = vadd.s32 %v1238, 1
    %vm1244 = vcmp.gt.s32.totalorder %v1243, 0
    %v1245 = vsel %vm1244, %v1243, 0
    %v1246 = vshrl.u32 %v1245, 5
    %v1247 = vand.u32 %v1245, 31
    %v1248 = vsub.s32 32, %v1247
    %v1249 = vshrl.u32 683565275, %v1248
    %v1250 = vshll.u32 683565275, %v1247
    %v1251 = vshrl.u32 2475754826, %v1248
    %v1252 = vor.u32 %v1250, %v1251
    %v1253 = vshll.u32 2475754826, %v1247
    %v1254 = vshrl.u32 2131351028, %v1248
    %v1255 = vor.u32 %v1253, %v1254
    %v1256 = vshll.u32 2131351028, %v1247
    %v1257 = vshrl.u32 2102212464, %v1248
    %v1258 = vor.u32 %v1256, %v1257
    %v1259 = vshll.u32 2102212464, %v1247
    %v1260 = vshrl.u32 920167782, %v1248
    %v1261 = vor.u32 %v1259, %v1260
    %v1262 = vshll.u32 920167782, %v1247
    %v1263 = vshrl.u32 1326507024, %v1248
    %v1264 = vor.u32 %v1262, %v1263
    %vm1265 = vcmp.lt.s32.totalorder %v1246, 1
    %vm1266 = vcmp.lt.s32.totalorder %v1246, 2
    %vm1267 = vcmp.lt.s32.totalorder %v1246, 3
    %vm1268 = vcmp.lt.s32.totalorder %v1246, 4
    %v1269 = vsel %vm1265, %v1249, %v1252
    %v1270 = vsel %vm1268, %v1258, 2102212464
    %v1271 = vsel %vm1267, %v1255, %v1270
    %v1272 = vsel %vm1266, %v1269, %v1271
    %v1273 = vsel %vm1265, %v1252, %v1255
    %v1274 = vsel %vm1268, %v1261, 920167782
    %v1275 = vsel %vm1267, %v1258, %v1274
    %v1276 = vsel %vm1266, %v1273, %v1275
    %v1277 = vsel %vm1265, %v1255, %v1258
    %v1278 = vsel %vm1268, %v1264, 1326507024
    %v1279 = vsel %vm1267, %v1261, %v1278
    %v1280 = vsel %vm1266, %v1277, %v1279
    %v1281 = vshll.u32 %v1241, 8
    %v1282 = vmul.u32.u64.compose %v1281, %v1280
    %v1283 = vextract.low.u32 %v1282
    %v1284 = vextract.high.u32 %v1282
    %v1285 = vmul.u32.u64.compose %v1281, %v1276
    %v1286 = vextract.low.u32 %v1285
    %v1287 = vextract.high.u32 %v1285
    %v1288 = vmul.u32 %v1281, %v1272
    %v1289 = vadd.s32 %v1284, %v1286
    %vm1290 = vc.u32 %v1284, %v1286
    %v1291 = vadd.s32 %v1287, 1
    %v1292 = vsel %vm1290, %v1291, %v1287
    %v1293 = vadd.s32 %v1288, %v1292
    %v1294 = vadd.s32 %v1293, 536870912
    %v1295 = vshrl.u32 %v1294, 30
    %v1296 = vshll.u32 %v1295, 30
    %v1297 = vsub.s32 %v1293, %v1296
    %vm1298 = vcmp.lt.s32.totalorder %v1297, 0
    %v1299 = vsub.s32 0, %v1297
    %v1300 = vsel %vm1298, %v1299, %v1297
    %v1301 = vclz %v1300
    %v1302 = vsub.s32 %v1301, 2
    %vm1303 = vcmp.gt.s32.totalorder 0, %v1302
    %v1304 = vsel %vm1303, 0, %v1302
    %v1305 = vsub.s32 32, %v1304
    %v1306 = vshll.u32 %v1297, %v1304
    %v1307 = vshrl.u32 %v1289, %v1305
    %v1308 = vor.u32 %v1306, %v1307
    %v1309 = vsub.s32 4294967266, %v1304
    %v1310 = vadd.s32 %v1309, 127
    %v1311 = vshll.u32 %v1310, 23
    %v1312 = vor.u32 4788187, %v1311
    %v1313 = vand.u32 2147483647, %v1312
    %v1315 = vcvt.s32.f32 %v1308
    %v1316 = vmul.f32 %v1315, %v1313
    %v1317 = vxor.u32 %v1316, 2147483648
    %v1318 = vsel %vm1235, %v1317, %v1316
    %v1319 = vsub.s32 4, %v1295
    %v1320 = vsel %vm1235, %v1319, %v1295
    %v1321 = vsel %vm1234, %v816, %v1318
    %v1322 = vsel %vm1234, 0, %v1320
    %v1323 = vcosq.f32.pop %v1321
    %v1324 = vsinq.f32.pop %v1321
    %vm1325 = vweird.f32 %v816
    %v1326 = vadd.s32 %v1322, 3
    %v1327 = vand.u32 %v1326, 3
    %vm1328 = vcmp.lt.s32.totalorder %v1327, 2
    %vm1329 = vcmp.eq.s32.totalorder %v1327, 0
    %v1330 = vxor.u32 %v1324, 2147483648
    %v1331 = vsel %vm1329, %v1323, %v1330
    %vm1332 = vcmp.eq.s32.totalorder %v1327, 2
    %v1333 = vxor.u32 %v1323, 2147483648
    %v1334 = vsel %vm1332, %v1333, %v1324
    %v1335 = vsel %vm1328, %v1331, %v1334
    %v1336 = vsel %vm1325, nan, %v1335
    %v1338 = vlaneseq
    %v1339 = vshrl.u32 %v1338, 7
    %v1340 = vsub.s32 0, %v1339
    %v1341 = vrot.slane %v754, %v1340
    %v1342 = vlaneseq
    %v1343 = vshrl.u32 %v1342, 7
    %v1344 = vsub.s32 1, %v1343
    %v1345 = vrot.slane %v754, %v1344
    %v1346 = vlaneseq
    %v1347 = vshrl.u32 %v1346, 7
    %v1348 = vsub.s32 2, %v1347
    %v1349 = vrot.slane %v754, %v1348
    %v1350 = vlaneseq
    %v1351 = vshrl.u32 %v1350, 7
    %v1352 = vsub.s32 3, %v1351
    %v1353 = vrot.slane %v754, %v1352
    %v1354 = vlaneseq
    %v1355 = vshrl.u32 %v1354, 7
    %v1356 = vsub.s32 4, %v1355
    %v1357 = vrot.slane %v754, %v1356
    %v1363 = vmul.f32 %v1341, %v735
    %v1364 = vmul.f32 %v1345, %v736
    %v1365 = vmul.f32 %v1349, %v737
    %v1366 = vmul.f32 %v1353, %v738
    %v1367 = vmul.f32 %v1357, %v739
    %v1369 = vlaneseq
    %v1370 = vshrl.u32 %v1369, 7
    %v1371 = vsub.s32 0, %v1370
    %v1372 = vrot.slane %v750, %v1371
    %v1373 = vlaneseq
    %v1374 = vshrl.u32 %v1373, 7
    %v1375 = vsub.s32 1, %v1374
    %v1376 = vrot.slane %v750, %v1375
    %v1377 = vlaneseq
    %v1378 = vshrl.u32 %v1377, 7
    %v1379 = vsub.s32 2, %v1378
    %v1380 = vrot.slane %v750, %v1379
    %v1381 = vlaneseq
    %v1382 = vshrl.u32 %v1381, 7
    %v1383 = vsub.s32 3, %v1382
    %v1384 = vrot.slane %v750, %v1383
    %v1385 = vlaneseq
    %v1386 = vshrl.u32 %v1385, 7
    %v1387 = vsub.s32 4, %v1386
    %v1388 = vrot.slane %v750, %v1387
    %v1394 = vmul.f32 %v1372, %v920
    %v1395 = vmul.f32 %v1376, %v1024
    %v1396 = vmul.f32 %v1380, %v1128
    %v1397 = vmul.f32 %v1384, %v1232
    %v1398 = vmul.f32 %v1388, %v1336
    %v1399 = vadd.f32 %v1363, %v1394
    %v1400 = vadd.f32 %v1364, %v1395
    %v1401 = vadd.f32 %v1365, %v1396
    %v1402 = vadd.f32 %v1366, %v1397
    %v1403 = vadd.f32 %v1367, %v1398
    %1404 = vst [vmem:[#allocation8] sm:$0xff] %v1399
    %1405 = vst [vmem:[#allocation8 + $0x8] sm:$0xff] %v1400
    %1406 = vst [vmem:[#allocation8 + $0x10] sm:$0xff] %v1401
    %1407 = vst [vmem:[#allocation8 + $0x18] sm:$0xff] %v1402
    %vm1408 = vcmask 916480
    %1409 = vst.msk [vmem:[#allocation8 + $0x20] sm:$0xff] %vm1408, %v1403
    // Predicated region
    $region26: #{tpu_custom_call.1} parent=1 // pred_check
      _
    $region27: #{tpu_custom_call.1} parent=1 // pred_check_branch
      %1411 = sbr.rel (0) target = $region29
    $region28: #{tpu_custom_call.1} parent=1 // pred_region
      %s1413 = ssub.s32 640, 640
      %1414 = vsyncadd [#allocation4], %s1413
      %s1416 = sshll.u32 [#allocation8], 4
      %s1417 = int_to_ptr.vmem [resolvable:$true] %s1416
      %1419 = dma.vmem_to_hbm [thread:$0]  %s1417, 640, %s3, [#allocation4]
    $region29: #{tpu_custom_call.1} parent=1 // pred_fallthru
      _
    // Predicated region
    $region30: #{tpu_custom_call.1} parent=1 // pred_check
      _
    $region31: #{tpu_custom_call.1} parent=1 // pred_check_branch
      %1421 = sbr.rel (0) target = $region33
    $region32: #{tpu_custom_call.1} parent=1 // pred_region
      %1422 = dma.done [#allocation4], 640
    $region33: #{tpu_custom_call.1} parent=1 // pred_fallthru
      _
    %1423 = vsyncpa [#allocation3], 1
    %1424 = vsyncpa [#allocation6], 1
    %1425 = vsyncpa [#allocation4], 1

</llo_original>
